<compile_context>
chip_gen: v5e
topology: v5e:2x2
jax: 0.10.0
libtpu: 0.0.40
codegen_flags: <defaults>
</compile_context>

<pallas_src>
import functools

import jax
import jax.numpy as jnp
from jax import lax
from jax.experimental import pallas as pl
from jax.experimental.pallas import tpu as pltpu


# --------------------------------- kernels ---------------------------------


def _upsample_gather_kernel(idx_ref, x_ref, o_ref):
    """idx_ref: (1, OW) int32 source-lane indices (resident across steps);
    x_ref: (BR, GW) packed input scanlines; o_ref: (BR, OW) upsampled rows."""
    x = x_ref[...]
    if x.dtype.itemsize < 4:
        # Gather in a 32-bit container; up/down cast is exact for a pure copy.
        x = x.astype(jnp.float32)
    idx = jnp.broadcast_to(idx_ref[...], (x.shape[0], idx_ref.shape[1]))
    out = jnp.take_along_axis(x, idx, axis=1, mode="clip")
    o_ref[...] = out.astype(o_ref.dtype)


def _upsample_matmul_kernel(e_ref, x_ref, o_ref, *, precision):
    """Fallback path: 0/1 selection matmul.  e_ref (GW, OW) is a resident
    selection matrix built once in the wrapper (no per-step iota/divide)."""
    o_ref[...] = jnp.dot(
        x_ref[...], e_ref[...],
        precision=precision,
        preferred_element_type=jnp.float32,
    ).astype(o_ref.dtype)


# ------------------------------ tiling helpers ------------------------------


def _sublane_multiple(itemsize: int) -> int:
    # f32 -> 8, bf16/f16 -> 16, int8/fp8 -> 32 (sub-32-bit packs along sublanes).
    return max(8, 32 // max(1, itemsize))


def _pack_factor(num_rows: int, w: int, s: int) -> int:
    """Scanlines packed per kernel row.  Keep g*W <= 128 (single-lane-group
    gather source), require g | num_rows (free reshape), prefer g that makes
    the output row g*s*s*W a multiple of 128 (lane-dense stores)."""
    if w > 128:
        return 1
    best, best_aligned = 1, 0
    for g in range(1, max(1, 128 // w) + 1):
        if num_rows % g:
            continue
        best = g
        if (g * s * s * w) % 128 == 0:
            best_aligned = g
    return best_aligned if best_aligned else best


def _rows_per_block(num_rows: int, out_row_bytes: int, itemsize: int) -> int:
    """Rows per grid step: sublane-multiple, ~4 MiB of output per step (safe
    inside every generation's scoped VMEM), >= 8 grid steps when possible so
    both v7x TensorCores get several pipelined steps."""
    sub = _sublane_multiple(itemsize)
    if num_rows <= sub:
        return num_rows
    budget = 4 << 20
    cap = max(sub, (budget // max(1, out_row_bytes)) // sub * sub)
    per8 = -(-num_rows // 8)                      # ceil(num_rows / 8)
    per8 = max(sub, -(-per8 // sub) * sub)        # round up to sublane multiple
    return min(cap, per8)


def _source_indices(w: int, s: int, g: int) -> jnp.ndarray:
    """idx[p] = source lane of output position p within one packed kernel row."""
    out_w = g * s * s * w
    p = jnp.arange(out_w, dtype=jnp.int32)
    return (p // (s * s * w)) * w + (p % (s * w)) // s


def _vmem_limit(*block_bytes: int) -> int:
    need = 2 * sum(block_bytes) + (4 << 20)
    return int(min(max(need, 16 << 20), 48 << 20))


# ----------------------------- pallas_call builders --------------------------


@functools.lru_cache(maxsize=None)
def _build_gather_call(rows_p, gw, out_w, br, dtype_name):
    dtype = jnp.dtype(dtype_name)
    itemsize = dtype.itemsize
    num_steps = pl.cdiv(rows_p, br)
    return jax.jit(pl.pallas_call(
        _upsample_gather_kernel,
        out_shape=jax.ShapeDtypeStruct((rows_p, out_w), dtype),
        grid=(num_steps,),
        in_specs=[
            pl.BlockSpec((1, out_w), lambda i: (0, 0)),   # resident index row
            pl.BlockSpec((br, gw), lambda i: (i, 0)),
        ],
        out_specs=pl.BlockSpec((br, out_w), lambda i: (i, 0)),
        compiler_params=pltpu.CompilerParams(
            dimension_semantics=("parallel",),
            vmem_limit_bytes=_vmem_limit(
                br * gw * itemsize, br * out_w * itemsize, out_w * 4),
        ),
        cost_estimate=pl.CostEstimate(
            flops=0, transcendentals=0,
            bytes_accessed=rows_p * (gw + out_w) * itemsize,
        ),
    ))


@functools.lru_cache(maxsize=None)
def _build_matmul_call(rows_p, gw, out_w, br, dtype_name):
    dtype = jnp.dtype(dtype_name)
    itemsize = dtype.itemsize
    num_steps = pl.cdiv(rows_p, br)
    # HIGHEST only needed for f32 exactness; native bf16 is exact for 0/1 weights.
    precision = lax.Precision.HIGHEST if itemsize >= 4 else lax.Precision.DEFAULT
    return jax.jit(pl.pallas_call(
        functools.partial(_upsample_matmul_kernel, precision=precision),
        out_shape=jax.ShapeDtypeStruct((rows_p, out_w), dtype),
        grid=(num_steps,),
        in_specs=[
            pl.BlockSpec((gw, out_w), lambda i: (0, 0)),  # resident 0/1 matrix
            pl.BlockSpec((br, gw), lambda i: (i, 0)),
        ],
        out_specs=pl.BlockSpec((br, out_w), lambda i: (i, 0)),
        compiler_params=pltpu.CompilerParams(
            dimension_semantics=("parallel",),
            vmem_limit_bytes=_vmem_limit(
                br * gw * itemsize, br * out_w * itemsize, gw * out_w * itemsize),
        ),
        cost_estimate=pl.CostEstimate(
            flops=2 * rows_p * gw * out_w, transcendentals=0,
            bytes_accessed=(rows_p * (gw + out_w) + gw * out_w) * itemsize,
        ),
    ))


# --------------------------------- wrapper ----------------------------------

_PATH = {}  # (shape, dtype, s) -> "gather" | "matmul"


def upsample_nearest(x: jnp.ndarray, scale_factor: int) -> jnp.ndarray:
    """Nearest-neighbor upsample of an NCHW tensor by an integer scale_factor."""
    n, c, h, w = x.shape
    s = int(scale_factor)
    if s == 1:
        return x
    ho, wo = h * s, w * s

    if not jnp.issubdtype(x.dtype, jnp.floating):
        # TODO(synk): integer dtypes fall back to plain JAX (rare for activations).
        return jnp.repeat(jnp.repeat(x, s, axis=2), s, axis=3)

    num_rows = n * c * h                      # one "row" = one W-length scanline
    g = _pack_factor(num_rows, w, s)          # scanlines packed per kernel row
    rows_p = num_rows // g
    gw = g * w                                # packed input row width (lanes)
    out_w = g * s * s * w                     # packed output row width (lanes)
    itemsize = jnp.dtype(x.dtype).itemsize
    br = _rows_per_block(rows_p, out_w * itemsize, itemsize)
    dtype_name = jnp.dtype(x.dtype).name

    x2 = x.reshape(rows_p, gw)                # free reshape (contiguous)

    key = (x.shape, dtype_name, s)
    path = _PATH.get(key, "gather" if gw <= 128 else "matmul")

    out2 = None
    if path == "gather":
        idx = _source_indices(w, s, g).reshape(1, out_w)
        fn = _build_gather_call(rows_p, gw, out_w, br, dtype_name)
        try:
            out2 = fn(idx, x2)
            _PATH[key] = "gather"
        except Exception:
            # Lane gather did not lower for this shape/generation: fall back to
            # the 0/1-selection matmul kernel (resident E, dtype-aware precision).
            path = "matmul"

    if out2 is None:
        idx = _source_indices(w, s, g)
        e = (jnp.arange(gw, dtype=jnp.int32)[:, None] == idx[None, :]).astype(x.dtype)
        fn = _build_matmul_call(rows_p, gw, out_w, br, dtype_name)
        out2 = fn(e, x2)
        _PATH[key] = "matmul"

    # Free reshape: (rows_p, g*s*s*W) row-major == (N, C, H*s, W*s) row-major.
    return out2.reshape(n, c, ho, wo)


class Upsample:
    """JAX/Pallas equivalent of the PyTorch Upsample module (nearest mode)."""

    def __init__(self, scale_factor, mode="nearest"):
        assert mode == "nearest", "only 'nearest' mode is implemented"
        # TODO(synk): non-integer / per-axis scale factors are not implemented.
        assert int(scale_factor) == scale_factor, "integer scale_factor required"
        self.scale_factor = int(scale_factor)
        self.mode = mode

    def __call__(self, x):
        return upsample_nearest(x, self.scale_factor)


if __name__ == "__main__":
    key = jax.random.PRNGKey(0)

    def ref_upsample(t, s):
        return jnp.repeat(jnp.repeat(t, s, axis=2), s, axis=3)

    # Primary check: small NCHW input consistent with the module's forward.
    x = jax.random.normal(key, (2, 4, 16, 16), dtype=jnp.float32)
    model = Upsample(scale_factor=2, mode="nearest")
    y = jax.block_until_ready(model(x))
    y_ref = ref_upsample(x, 2)
    assert y.shape == (2, 4, 32, 32), y.shape
    assert y.dtype == x.dtype
    assert jnp.allclose(y.astype(jnp.float32), y_ref.astype(jnp.float32),
                        atol=1e-5), "mismatch vs reference nearest upsample"

    # Ragged grid (last block partially filled) stays correct.
    x_r = jax.random.normal(jax.random.PRNGKey(1), (2, 3, 20, 16), dtype=jnp.float32)
    y_r = jax.block_until_ready(upsample_nearest(x_r, 2))
    assert jnp.allclose(y_r.astype(jnp.float32),
                        ref_upsample(x_r, 2).astype(jnp.float32), atol=1e-5)

    # bf16 path (16-row sublane packing, in-kernel f32 gather container).
    x_b = jax.random.normal(jax.random.PRNGKey(2), (2, 4, 32, 16)).astype(jnp.bfloat16)
    y_b = jax.block_until_ready(upsample_nearest(x_b, 2))
    assert y_b.dtype == jnp.bfloat16
    assert jnp.allclose(y_b.astype(jnp.float32),
                        ref_upsample(x_b, 2).astype(jnp.float32), atol=1e-5)

    print("KERNEL_OK")
</pallas_src>

<mosaic_0001>
module attributes {stable_mosaic.version = 11 : i64} {
  func.func @_upsample_matmul_kernel(%arg0: i32, %arg1: memref<128x512xf32, #tpu.memory_space<vmem>>, %arg2: memref<8x128xf32, #tpu.memory_space<vmem>>, %arg3: memref<8x512xf32, #tpu.memory_space<vmem>>) attributes {dimension_semantics = [#tpu.dimension_semantics<parallel>], iteration_bounds = array<i64: 2>, scalar_prefetch = 0 : i64, scratch_operands = 0 : i64, tpu.core_type = #tpu.core_type<tc>, window_params = [{pipeline_mode = #tpu.pipeline_mode<synchronous>, transform_indices = @transform_0, window_bounds = array<i64: 128, 512>}, {transform_indices = @transform_1, window_bounds = array<i64: 8, 128>}, {transform_indices = @transform_2, window_bounds = array<i64: 8, 512>}]} {
    %c0 = arith.constant 0 : index
    %c0_0 = arith.constant 0 : index
    %0 = vector.load %arg2[%c0, %c0_0] : memref<8x128xf32, #tpu.memory_space<vmem>>, vector<8x128xf32>
    %c0_1 = arith.constant 0 : index
    %c0_2 = arith.constant 0 : index
    %1 = vector.load %arg1[%c0_1, %c0_2] : memref<128x512xf32, #tpu.memory_space<vmem>>, vector<128x512xf32>
    %cst = arith.constant dense<0.000000e+00> : vector<8x512xf32>
    %2 = tpu.matmul %0, %1, %cst {dimension_numbers = #tpu.dot_dimension_numbers<[1], [0], [0], [1], [0, 0, 1, 1], [], []>, precision = #tpu.contract_precision<fp32>} : vector<8x128xf32>, vector<128x512xf32>, vector<8x512xf32> -> vector<8x512xf32>
    %c0_3 = arith.constant 0 : index
    %c0_4 = arith.constant 0 : index
    %3 = vector.load %arg3[%c0_3, %c0_4] : memref<8x512xf32, #tpu.memory_space<vmem>>, vector<8x512xf32>
    tpu.vector_store %arg3[%c0_3, %c0_4], %2 {strides = array<i32>} : memref<8x512xf32, #tpu.memory_space<vmem>>, vector<8x512xf32>,
    return
  }
  func.func @transform_0(%arg0: i32) -> (i32, i32) {
    %c0_i32 = arith.constant 0 : i32
    %c0_i32_0 = arith.constant 0 : i32
    %c0_i32_1 = arith.constant 0 : i32
    return %c0_i32, %c0_i32_0 : i32, i32
  }
  func.func @transform_1(%arg0: i32) -> (i32, i32) {
    %c0_i32 = arith.constant 0 : i32
    %c0_i32_0 = arith.constant 0 : i32
    return %arg0, %c0_i32 : i32, i32
  }
  func.func @transform_2(%arg0: i32) -> (i32, i32) {
    %c0_i32 = arith.constant 0 : i32
    %c0_i32_0 = arith.constant 0 : i32
    return %arg0, %c0_i32 : i32, i32
  }
}

</mosaic_0001>

<llo_original>
// kernel: tpu_custom_call.1
$region0: #{tpu_custom_call.1}
  #allocation0 [shape = 'u32[]', space=smem, size = 0x4, offset = 0x4, fixed_abs, tag = 'smem constant byte address 0x4 - core index']
  #allocation1 [shape = 'u32[72,128]{1,0:T(1,128)}', space=vmem, size = 0x9000, scoped, tag = 'internal scratch']
  %s0 = inlined_call_operand.hbm [shape: f32[128,512], index: 0, kind: input, shape index: {}]
  %s1 = inlined_call_operand.hbm [shape: f32[16,128], index: 1, kind: input, shape index: {}]
  %s2 = inlined_call_operand.hbm [shape: f32[16,512], index: 2, kind: output, shape index: {}]
  %s3 = sld [smem:[#allocation0]]
  $region49: #{tpu_custom_call.1} parent=0
    _
  %s5 = ssub.s32 1, %s3
  %s6 = scalar_select 0, %s5, %s3
  $region1: #{tpu_custom_call.1} parent=0
    #allocation2 [shape = 'u8[262144]{0}', space=vmem, size = 0x40000, scoped, tag = 'input window, operand 0, single buffered']
    #allocation3 [shape = 's32[2]{0}', space=sflag, size = 0x8, scoped, tag = 'scoped memory for tpu_custom_call.1']
    #allocation4 [shape = 's32[2]{0}', space=sflag, size = 0x8, scoped, tag = 'scoped memory for tpu_custom_call.1']
    #allocation5 [shape = 'u8[8192]{0}', space=vmem, size = 0x2000, scoped, tag = 'input window, operand 1']
    #allocation6 [shape = 's32[2]{0}', space=sflag, size = 0x8, scoped, tag = 'scoped memory for tpu_custom_call.1']
    #allocation7 [shape = 'u8[32768]{0}', space=vmem, size = 0x8000, scoped, tag = 'output window, operand 0']
    %7 = vsyncpa [#allocation3], 0
    %8 = vsyncpa [#allocation6], 0
    %s9 = scalar_lea.sflag [#allocation6], 1
    %10 = vsyncpa %s9, 0
    %11 = vsyncpa [#allocation4], 0
    %s12 = scalar_lea.sflag [#allocation4], 1
    %13 = vsyncpa %s12, 0
    loop: start=0, step=1, limit=4
    $region2: #{tpu_custom_call.1} parent=1 // loop_pre_header
      _
    $region3: #{tpu_custom_call.1} parent=1 // loop_header
      %s15 = sphi 0, %s19
      %p16 = scmp.ge.s32.totalorder %s15, 4
      %s23 = sphi 0, %s23
      %s25 = sphi 0, %s23
      %s26 = sphi 0, %s25
      %s40 = sphi 0, %s26
      %s46 = sphi 0, %s48
      %s49 = sphi 0, %s46
      %s50 = sphi 0, %s49
      %s66 = sphi 0, %s50
      %s72 = sphi 0, %s74
      %s75 = sphi 0, %s72
      %s76 = sphi 0, %s75
      %s92 = sphi 0, %s76
    $region4: #{tpu_custom_call.1} parent=1 // loop_header_branch
      %18 = sbr.rel (%p16) target = $region8
    $region5: #{tpu_custom_call.1} parent=1 // loop_body
      %s20 = ssub.s32 %s15, 1
      %s21 = ssub.s32 %s15, 2
      %s22 = sadd.s32 %s15, 1
      %s24 = sadd.s32 %s23, 1
      %p27 = scmp.eq.s32.totalorder %s15, 1
      %p28 = scmp.ne.s32.totalorder %s23, %s25
      %p29 = scmp.eq.s32.totalorder %s15, 0
      %p30 = por %p28, %p29
      %p31 = scmp.ne.s32.totalorder %s23, %s25
      %p32 = scmp.eq.s32.totalorder %s20, 1
      %p33 = por %p31, %p32
      %p34 = scmp.ne.s32.totalorder %s25, %s26
      %p35 = scmp.eq.s32.totalorder %s20, 0
      %p36 = por %p34, %p35
      %p37 = scmp.ne.s32.totalorder %s25, %s26
      %p38 = scmp.eq.s32.totalorder %s21, 1
      %p39 = por %p37, %p38
      %p41 = scmp.ne.s32.totalorder %s26, %s40
      %p42 = scmp.eq.s32.totalorder %s21, 0
      %p43 = por %p41, %p42
      %s44 = ssub.s32 %s15, %s22
      %p45 = scmp.eq.s32.totalorder %s44, 0
      %s47 = sadd.s32 %s46, 1
      %s48 = scalar_select %p45, %s46, %s47
      %p51 = pneg %p45
      %p52 = scmp.eq.s32.totalorder %s15, 1
      %p53 = por %p51, %p52
      %p54 = scmp.ne.s32.totalorder %s46, %s49
      %p55 = scmp.eq.s32.totalorder %s15, 0
      %p56 = por %p54, %p55
      %p57 = scmp.ne.s32.totalorder %s46, %s49
      %p58 = scmp.eq.s32.totalorder %s20, 1
      %p59 = por %p57, %p58
      %p60 = scmp.ne.s32.totalorder %s49, %s50
      %p61 = scmp.eq.s32.totalorder %s20, 0
      %p62 = por %p60, %p61
      %p63 = scmp.ne.s32.totalorder %s49, %s50
      %p64 = scmp.eq.s32.totalorder %s21, 1
      %p65 = por %p63, %p64
      %p67 = scmp.ne.s32.totalorder %s50, %s66
      %p68 = scmp.eq.s32.totalorder %s21, 0
      %p69 = por %p67, %p68
      %s70 = ssub.s32 %s15, %s22
      %p71 = scmp.eq.s32.totalorder %s70, 0
      %s73 = sadd.s32 %s72, 1
      %s74 = scalar_select %p71, %s72, %s73
      %p77 = pneg %p71
      %p78 = scmp.eq.s32.totalorder %s15, 1
      %p79 = por %p77, %p78
      %p80 = scmp.ne.s32.totalorder %s72, %s75
      %p81 = scmp.eq.s32.totalorder %s15, 0
      %p82 = por %p80, %p81
      %p83 = scmp.ne.s32.totalorder %s72, %s75
      %p84 = scmp.eq.s32.totalorder %s20, 1
      %p85 = por %p83, %p84
      %p86 = scmp.ne.s32.totalorder %s75, %s76
      %p87 = scmp.eq.s32.totalorder %s20, 0
      %p88 = por %p86, %p87
      %p89 = scmp.ne.s32.totalorder %s75, %s76
      %p90 = scmp.eq.s32.totalorder %s21, 1
      %p91 = por %p89, %p90
      %p93 = scmp.ne.s32.totalorder %s76, %s92
      %p94 = scmp.eq.s32.totalorder %s21, 0
      %p95 = por %p93, %p94
      %p96 = scmp.le.s32.totalorder 1, %s15
      %p97 = scmp.lt.s32.totalorder %s15, 3
      %p98 = pnand %p96, %p97
      %p99 = pneg %p98
      // Predicated region
      $region9: #{tpu_custom_call.1} parent=5 // pred_check
        _
      $region10: #{tpu_custom_call.1} parent=5 // pred_check_branch
        %101 = sbr.rel (%p98) target = $region12
      $region11: #{tpu_custom_call.1} parent=5 // pred_region
        %s102 = ssub.s32 %s15, 1
        // Predicated region
        $region13: #{tpu_custom_call.1} parent=11 // pred_check
          %p103 = pneg %p36
        $region14: #{tpu_custom_call.1} parent=11 // pred_check_branch
          %105 = sbr.rel (%p103) target = $region16
        $region15: #{tpu_custom_call.1} parent=11 // pred_region
          %107 = vsyncadd [#allocation3], 0
          %s108 = sshll.u32 %s0, 4
          %s109 = int_to_ptr.hbm [resolvable:$true] %s108
          %s110 = sshll.u32 [#allocation2], 4
          %s111 = int_to_ptr.vmem [resolvable:$true] %s110
          %116 = dma.hbm_to_vmem [thread:$0]  %s109, 8192, %s111, [#allocation3], 512, 512, 32
        $region16: #{tpu_custom_call.1} parent=11 // pred_fallthru
          _
      $region12: #{tpu_custom_call.1} parent=5 // pred_fallthru
        _
      %p117 = scmp.lt.s32.totalorder %s15, 2
      // Predicated region
      $region17: #{tpu_custom_call.1} parent=5 // pred_check
        %p118 = pneg %p117
      $region18: #{tpu_custom_call.1} parent=5 // pred_check_branch
        %120 = sbr.rel (%p118) target = $region20
      $region19: #{tpu_custom_call.1} parent=5 // pred_region
        // Predicated region
        $region21: #{tpu_custom_call.1} parent=19 // pred_check
          %p121 = pneg %p56
        $region22: #{tpu_custom_call.1} parent=19 // pred_check_branch
          %123 = sbr.rel (%p121) target = $region24
        $region23: #{tpu_custom_call.1} parent=19 // pred_region
          %s124 = sand.u32 %s46, 1
          %s125 = scalar_lea.sflag [#allocation6], %s124
          %s126 = sand.u32 %s46, 1
          %s127 = smul.addr %s126, 8
          %s128 = scalar_lea.vmem [#allocation5], %s127
          %130 = vsyncadd %s125, 0
          %s131 = smul.addr %s15, 8
          %s132 = scalar_lea.hbm %s1, %s131
          %s134 = sshll.u32 %s132, 4
          %s135 = int_to_ptr.hbm [resolvable:$true] %s134
          %s136 = sshll.u32 %s128, 4
          %s137 = int_to_ptr.vmem [resolvable:$true] %s136
          %139 = dma.hbm_to_vmem [thread:$0]  %s135, 128, %s137, %s125
        $region24: #{tpu_custom_call.1} parent=19 // pred_fallthru
          _
      $region20: #{tpu_custom_call.1} parent=5 // pred_fallthru
        _
      %p140 = scmp.le.s32.totalorder 1, %s15
      %p141 = scmp.lt.s32.totalorder %s15, 3
      %p142 = pnand %p140, %p141
      %p143 = pneg %p142
      // Predicated region
      $region25: #{tpu_custom_call.1} parent=5 // pred_check
        _
      $region26: #{tpu_custom_call.1} parent=5 // pred_check_branch
        %145 = sbr.rel (%p142) target = $region28
      $region27: #{tpu_custom_call.1} parent=5 // pred_region
        %s146 = ssub.s32 %s15, 1
        // Predicated region
        $region29: #{tpu_custom_call.1} parent=27 // pred_check
          %p147 = pneg %p36
        $region30: #{tpu_custom_call.1} parent=27 // pred_check_branch
          %149 = sbr.rel (%p147) target = $region32
        $region31: #{tpu_custom_call.1} parent=27 // pred_region
          %151 = dma.done [#allocation3], 8192
        $region32: #{tpu_custom_call.1} parent=27 // pred_fallthru
          _
        %s152 = sand.u32 %s49, 1
        %s153 = scalar_lea.sflag [#allocation6], %s152
        %s154 = sand.u32 %s49, 1
        %s155 = smul.addr %s154, 8
        %s156 = scalar_lea.vmem [#allocation5], %s155
        // Predicated region
        $region33: #{tpu_custom_call.1} parent=27 // pred_check
          %p157 = pneg %p62
        $region34: #{tpu_custom_call.1} parent=27 // pred_check_branch
          %159 = sbr.rel (%p157) target = $region36
        $region35: #{tpu_custom_call.1} parent=27 // pred_region
          %161 = dma.done %s153, 128
        $region36: #{tpu_custom_call.1} parent=27 // pred_fallthru
          _
        %p162 = pneg %p36
        %p163 = pneg %p33
        %s164 = sand.u32 %s49, 1
        %s165 = scalar_lea.sflag [#allocation6], %s164
        %s166 = sand.u32 %s49, 1
        %s167 = smul.addr %s166, 8
        %s168 = scalar_lea.vmem [#allocation5], %s167
        %p169 = pneg %p62
        %p170 = pneg %p59
        %p171 = pneg %p88
        %p172 = pneg %p85
        %s173 = sand.u32 %s75, 1
        %s174 = scalar_lea.sflag [#allocation4], %s173
        %s175 = sand.u32 %s75, 1
        %s176 = smul.addr %s175, 32
        %s177 = scalar_lea.vmem [#allocation7], %s176
        %v178 = vld [vmem:[%s156] sm:$0xff]
        %v179 = vld [vmem:[#allocation2] sm:$0xff]
        %v180 = vld [vmem:[#allocation2 + $0x8] sm:$0xff]
        %v181 = vld [vmem:[#allocation2 + $0x10] sm:$0xff]
        %v182 = vld [vmem:[#allocation2 + $0x18] sm:$0xff]
        %v183 = vld [vmem:[#allocation2 + $0x20] sm:$0xff]
        %v184 = vld [vmem:[#allocation2 + $0x28] sm:$0xff]
        %v185 = vld [vmem:[#allocation2 + $0x30] sm:$0xff]
        %v186 = vld [vmem:[#allocation2 + $0x38] sm:$0xff]
        %v187 = vld [vmem:[#allocation2 + $0x40] sm:$0xff]
        %v188 = vld [vmem:[#allocation2 + $0x48] sm:$0xff]
        %v189 = vld [vmem:[#allocation2 + $0x50] sm:$0xff]
        %v190 = vld [vmem:[#allocation2 + $0x58] sm:$0xff]
        %v191 = vld [vmem:[#allocation2 + $0x60] sm:$0xff]
        %v192 = vld [vmem:[#allocation2 + $0x68] sm:$0xff]
        %v193 = vld [vmem:[#allocation2 + $0x70] sm:$0xff]
        %v194 = vld [vmem:[#allocation2 + $0x78] sm:$0xff]
        %v195 = vld [vmem:[#allocation2 + $0x80] sm:$0xff]
        %v196 = vld [vmem:[#allocation2 + $0x88] sm:$0xff]
        %v197 = vld [vmem:[#allocation2 + $0x90] sm:$0xff]
        %v198 = vld [vmem:[#allocation2 + $0x98] sm:$0xff]
        %v199 = vld [vmem:[#allocation2 + $0xa0] sm:$0xff]
        %v200 = vld [vmem:[#allocation2 + $0xa8] sm:$0xff]
        %v201 = vld [vmem:[#allocation2 + $0xb0] sm:$0xff]
        %v202 = vld [vmem:[#allocation2 + $0xb8] sm:$0xff]
        %v203 = vld [vmem:[#allocation2 + $0xc0] sm:$0xff]
        %v204 = vld [vmem:[#allocation2 + $0xc8] sm:$0xff]
        %v205 = vld [vmem:[#allocation2 + $0xd0] sm:$0xff]
        %v206 = vld [vmem:[#allocation2 + $0xd8] sm:$0xff]
        %v207 = vld [vmem:[#allocation2 + $0xe0] sm:$0xff]
        %v208 = vld [vmem:[#allocation2 + $0xe8] sm:$0xff]
        %v209 = vld [vmem:[#allocation2 + $0xf0] sm:$0xff]
        %v210 = vld [vmem:[#allocation2 + $0xf8] sm:$0xff]
        %v211 = vld [vmem:[#allocation2 + $0x100] sm:$0xff]
        %v212 = vld [vmem:[#allocation2 + $0x108] sm:$0xff]
        %v213 = vld [vmem:[#allocation2 + $0x110] sm:$0xff]
        %v214 = vld [vmem:[#allocation2 + $0x118] sm:$0xff]
        %v215 = vld [vmem:[#allocation2 + $0x120] sm:$0xff]
        %v216 = vld [vmem:[#allocation2 + $0x128] sm:$0xff]
        %v217 = vld [vmem:[#allocation2 + $0x130] sm:$0xff]
        %v218 = vld [vmem:[#allocation2 + $0x138] sm:$0xff]
        %v219 = vld [vmem:[#allocation2 + $0x140] sm:$0xff]
        %v220 = vld [vmem:[#allocation2 + $0x148] sm:$0xff]
        %v221 = vld [vmem:[#allocation2 + $0x150] sm:$0xff]
        %v222 = vld [vmem:[#allocation2 + $0x158] sm:$0xff]
        %v223 = vld [vmem:[#allocation2 + $0x160] sm:$0xff]
        %v224 = vld [vmem:[#allocation2 + $0x168] sm:$0xff]
        %v225 = vld [vmem:[#allocation2 + $0x170] sm:$0xff]
        %v226 = vld [vmem:[#allocation2 + $0x178] sm:$0xff]
        %v227 = vld [vmem:[#allocation2 + $0x180] sm:$0xff]
        %v228 = vld [vmem:[#allocation2 + $0x188] sm:$0xff]
        %v229 = vld [vmem:[#allocation2 + $0x190] sm:$0xff]
        %v230 = vld [vmem:[#allocation2 + $0x198] sm:$0xff]
        %v231 = vld [vmem:[#allocation2 + $0x1a0] sm:$0xff]
        %v232 = vld [vmem:[#allocation2 + $0x1a8] sm:$0xff]
        %v233 = vld [vmem:[#allocation2 + $0x1b0] sm:$0xff]
        %v234 = vld [vmem:[#allocation2 + $0x1b8] sm:$0xff]
        %v235 = vld [vmem:[#allocation2 + $0x1c0] sm:$0xff]
        %v236 = vld [vmem:[#allocation2 + $0x1c8] sm:$0xff]
        %v237 = vld [vmem:[#allocation2 + $0x1d0] sm:$0xff]
        %v238 = vld [vmem:[#allocation2 + $0x1d8] sm:$0xff]
        %v239 = vld [vmem:[#allocation2 + $0x1e0] sm:$0xff]
        %v240 = vld [vmem:[#allocation2 + $0x1e8] sm:$0xff]
        %v241 = vld [vmem:[#allocation2 + $0x1f0] sm:$0xff]
        %v242 = vld [vmem:[#allocation2 + $0x1f8] sm:$0xff]
        %v243 = vand.u32 %v239, 4294901760
        %244 = vmatpush.msra.mxu0 %v243
        %v245 = vand.u32 %v235, 4294901760
        %246 = vmatpush.msra.mxu0 %v245
        %v247 = vand.u32 %v231, 4294901760
        %248 = vmatpush.msra.mxu0 %v247
        %v249 = vand.u32 %v227, 4294901760
        %250 = vmatpush.msra.mxu0 %v249
        %v251 = vand.u32 %v223, 4294901760
        %252 = vmatpush.msra.mxu0 %v251
        %v253 = vand.u32 %v219, 4294901760
        %254 = vmatpush.msra.mxu0 %v253
        %v255 = vand.u32 %v215, 4294901760
        %256 = vmatpush.msra.mxu0 %v255
        %v257 = vand.u32 %v211, 4294901760
        %258 = vmatpush.msra.mxu0 %v257
        %v259 = vand.u32 %v207, 4294901760
        %260 = vmatpush.msra.mxu0 %v259
        %v261 = vand.u32 %v203, 4294901760
        %262 = vmatpush.msra.mxu0 %v261
        %v263 = vand.u32 %v199, 4294901760
        %264 = vmatpush.msra.mxu0 %v263
        %v265 = vand.u32 %v195, 4294901760
        %266 = vmatpush.msra.mxu0 %v265
        %v267 = vand.u32 %v191, 4294901760
        %268 = vmatpush.msra.mxu0 %v267
        %v269 = vand.u32 %v187, 4294901760
        %270 = vmatpush.msra.mxu0 %v269
        %v271 = vand.u32 %v183, 4294901760
        %272 = vmatpush.msra.mxu0 %v271
        %v273 = vand.u32 %v179, 4294901760
        %274 = vmatpush.msra.mxu0 %v273
        %v275 = vand.u32 %v178, 4294901760
        %v276 = vsub.f32 %v178, %v275
        %v277 = vand.u32 %v276, 4294901760
        %v278 = vsub.f32 %v276, %v277
        %v279 = vand.u32 %v278, 4294901760
        %280 = vmatmul.f32.gmra.mxu0 %v279
        %v281 = vpop.f32.mrf.mxu0
        %v282 = vadd.f32 0.0, %v281
        %283 = vdwg.mxu0
        %v284 = vand.u32 %v239, 4294901760
        %v285 = vsub.f32 %v239, %v284
        %v286 = vand.u32 %v285, 4294901760
        %v287 = vsub.f32 %v285, %v286
        %v288 = vand.u32 %v287, 4294901760
        %289 = vmatpush.msra.mxu0 %v288
        %v290 = vand.u32 %v235, 4294901760
        %v291 = vsub.f32 %v235, %v290
        %v292 = vand.u32 %v291, 4294901760
        %v293 = vsub.f32 %v291, %v292
        %v294 = vand.u32 %v293, 4294901760
        %295 = vmatpush.msra.mxu0 %v294
        %v296 = vand.u32 %v231, 4294901760
        %v297 = vsub.f32 %v231, %v296
        %v298 = vand.u32 %v297, 4294901760
        %v299 = vsub.f32 %v297, %v298
        %v300 = vand.u32 %v299, 4294901760
        %301 = vmatpush.msra.mxu0 %v300
        %v302 = vand.u32 %v227, 4294901760
        %v303 = vsub.f32 %v227, %v302
        %v304 = vand.u32 %v303, 4294901760
        %v305 = vsub.f32 %v303, %v304
        %v306 = vand.u32 %v305, 4294901760
        %307 = vmatpush.msra.mxu0 %v306
        %v308 = vand.u32 %v223, 4294901760
        %v309 = vsub.f32 %v223, %v308
        %v310 = vand.u32 %v309, 4294901760
        %v311 = vsub.f32 %v309, %v310
        %v312 = vand.u32 %v311, 4294901760
        %313 = vmatpush.msra.mxu0 %v312
        %v314 = vand.u32 %v219, 4294901760
        %v315 = vsub.f32 %v219, %v314
        %v316 = vand.u32 %v315, 4294901760
        %v317 = vsub.f32 %v315, %v316
        %v318 = vand.u32 %v317, 4294901760
        %319 = vmatpush.msra.mxu0 %v318
        %v320 = vand.u32 %v215, 4294901760
        %v321 = vsub.f32 %v215, %v320
        %v322 = vand.u32 %v321, 4294901760
        %v323 = vsub.f32 %v321, %v322
        %v324 = vand.u32 %v323, 4294901760
        %325 = vmatpush.msra.mxu0 %v324
        %v326 = vand.u32 %v211, 4294901760
        %v327 = vsub.f32 %v211, %v326
        %v328 = vand.u32 %v327, 4294901760
        %v329 = vsub.f32 %v327, %v328
        %v330 = vand.u32 %v329, 4294901760
        %331 = vmatpush.msra.mxu0 %v330
        %v332 = vand.u32 %v207, 4294901760
        %v333 = vsub.f32 %v207, %v332
        %v334 = vand.u32 %v333, 4294901760
        %v335 = vsub.f32 %v333, %v334
        %v336 = vand.u32 %v335, 4294901760
        %337 = vmatpush.msra.mxu0 %v336
        %v338 = vand.u32 %v203, 4294901760
        %v339 = vsub.f32 %v203, %v338
        %v340 = vand.u32 %v339, 4294901760
        %v341 = vsub.f32 %v339, %v340
        %v342 = vand.u32 %v341, 4294901760
        %343 = vmatpush.msra.mxu0 %v342
        %v344 = vand.u32 %v199, 4294901760
        %v345 = vsub.f32 %v199, %v344
        %v346 = vand.u32 %v345, 4294901760
        %v347 = vsub.f32 %v345, %v346
        %v348 = vand.u32 %v347, 4294901760
        %349 = vmatpush.msra.mxu0 %v348
        %v350 = vand.u32 %v195, 4294901760
        %v351 = vsub.f32 %v195, %v350
        %v352 = vand.u32 %v351, 4294901760
        %v353 = vsub.f32 %v351, %v352
        %v354 = vand.u32 %v353, 4294901760
        %355 = vmatpush.msra.mxu0 %v354
        %v356 = vand.u32 %v191, 4294901760
        %v357 = vsub.f32 %v191, %v356
        %v358 = vand.u32 %v357, 4294901760
        %v359 = vsub.f32 %v357, %v358
        %v360 = vand.u32 %v359, 4294901760
        %361 = vmatpush.msra.mxu0 %v360
        %v362 = vand.u32 %v187, 4294901760
        %v363 = vsub.f32 %v187, %v362
        %v364 = vand.u32 %v363, 4294901760
        %v365 = vsub.f32 %v363, %v364
        %v366 = vand.u32 %v365, 4294901760
        %367 = vmatpush.msra.mxu0 %v366
        %v368 = vand.u32 %v183, 4294901760
        %v369 = vsub.f32 %v183, %v368
        %v370 = vand.u32 %v369, 4294901760
        %v371 = vsub.f32 %v369, %v370
        %v372 = vand.u32 %v371, 4294901760
        %373 = vmatpush.msra.mxu0 %v372
        %v374 = vand.u32 %v179, 4294901760
        %v375 = vsub.f32 %v179, %v374
        %v376 = vand.u32 %v375, 4294901760
        %v377 = vsub.f32 %v375, %v376
        %v378 = vand.u32 %v377, 4294901760
        %379 = vmatpush.msra.mxu0 %v378
        %v380 = vand.u32 %v178, 4294901760
        %381 = vmatmul.f32.gmra.mxu0 %v380
        %v382 = vpop.f32.mrf.mxu0
        %v383 = vadd.f32 %v282, %v382
        %384 = vdwg.mxu0
        %v385 = vand.u32 %v239, 4294901760
        %v386 = vsub.f32 %v239, %v385
        %387 = vmatpush.msra.mxu0 %v386
        %v388 = vand.u32 %v235, 4294901760
        %v389 = vsub.f32 %v235, %v388
        %390 = vmatpush.msra.mxu0 %v389
        %v391 = vand.u32 %v231, 4294901760
        %v392 = vsub.f32 %v231, %v391
        %393 = vmatpush.msra.mxu0 %v392
        %v394 = vand.u32 %v227, 4294901760
        %v395 = vsub.f32 %v227, %v394
        %396 = vmatpush.msra.mxu0 %v395
        %v397 = vand.u32 %v223, 4294901760
        %v398 = vsub.f32 %v223, %v397
        %399 = vmatpush.msra.mxu0 %v398
        %v400 = vand.u32 %v219, 4294901760
        %v401 = vsub.f32 %v219, %v400
        %402 = vmatpush.msra.mxu0 %v401
        %v403 = vand.u32 %v215, 4294901760
        %v404 = vsub.f32 %v215, %v403
        %405 = vmatpush.msra.mxu0 %v404
        %v406 = vand.u32 %v211, 4294901760
        %v407 = vsub.f32 %v211, %v406
        %408 = vmatpush.msra.mxu0 %v407
        %v409 = vand.u32 %v207, 4294901760
        %v410 = vsub.f32 %v207, %v409
        %411 = vmatpush.msra.mxu0 %v410
        %v412 = vand.u32 %v203, 4294901760
        %v413 = vsub.f32 %v203, %v412
        %414 = vmatpush.msra.mxu0 %v413
        %v415 = vand.u32 %v199, 4294901760
        %v416 = vsub.f32 %v199, %v415
        %417 = vmatpush.msra.mxu0 %v416
        %v418 = vand.u32 %v195, 4294901760
        %v419 = vsub.f32 %v195, %v418
        %420 = vmatpush.msra.mxu0 %v419
        %v421 = vand.u32 %v191, 4294901760
        %v422 = vsub.f32 %v191, %v421
        %423 = vmatpush.msra.mxu0 %v422
        %v424 = vand.u32 %v187, 4294901760
        %v425 = vsub.f32 %v187, %v424
        %426 = vmatpush.msra.mxu0 %v425
        %v427 = vand.u32 %v183, 4294901760
        %v428 = vsub.f32 %v183, %v427
        %429 = vmatpush.msra.mxu0 %v428
        %v430 = vand.u32 %v179, 4294901760
        %v431 = vsub.f32 %v179, %v430
        %432 = vmatpush.msra.mxu0 %v431
        %v433 = vand.u32 %v178, 4294901760
        %v434 = vsub.f32 %v178, %v433
        %435 = vmatmul.f32.gmra.mxu0 %v434
        %v436 = vpop.f32.mrf.mxu0
        %v437 = vadd.f32 %v383, %v436
        %438 = vdwg.mxu0
        %v439 = vand.u32 %v239, 4294901760
        %440 = vmatpush.msra.mxu0 %v439
        %v441 = vand.u32 %v235, 4294901760
        %442 = vmatpush.msra.mxu0 %v441
        %v443 = vand.u32 %v231, 4294901760
        %444 = vmatpush.msra.mxu0 %v443
        %v445 = vand.u32 %v227, 4294901760
        %446 = vmatpush.msra.mxu0 %v445
        %v447 = vand.u32 %v223, 4294901760
        %448 = vmatpush.msra.mxu0 %v447
        %v449 = vand.u32 %v219, 4294901760
        %450 = vmatpush.msra.mxu0 %v449
        %v451 = vand.u32 %v215, 4294901760
        %452 = vmatpush.msra.mxu0 %v451
        %v453 = vand.u32 %v211, 4294901760
        %454 = vmatpush.msra.mxu0 %v453
        %v455 = vand.u32 %v207, 4294901760
        %456 = vmatpush.msra.mxu0 %v455
        %v457 = vand.u32 %v203, 4294901760
        %458 = vmatpush.msra.mxu0 %v457
        %v459 = vand.u32 %v199, 4294901760
        %460 = vmatpush.msra.mxu0 %v459
        %v461 = vand.u32 %v195, 4294901760
        %462 = vmatpush.msra.mxu0 %v461
        %v463 = vand.u32 %v191, 4294901760
        %464 = vmatpush.msra.mxu0 %v463
        %v465 = vand.u32 %v187, 4294901760
        %466 = vmatpush.msra.mxu0 %v465
        %v467 = vand.u32 %v183, 4294901760
        %468 = vmatpush.msra.mxu0 %v467
        %v469 = vand.u32 %v179, 4294901760
        %470 = vmatpush.msra.mxu0 %v469
        %v471 = vand.u32 %v178, 4294901760
        %v472 = vsub.f32 %v178, %v471
        %v473 = vand.u32 %v472, 4294901760
        %474 = vmatmul.f32.gmra.mxu0 %v473
        %v475 = vpop.f32.mrf.mxu0
        %v476 = vadd.f32 %v437, %v475
        %477 = vdwg.mxu0
        %v478 = vand.u32 %v239, 4294901760
        %v479 = vsub.f32 %v239, %v478
        %v480 = vand.u32 %v479, 4294901760
        %481 = vmatpush.msra.mxu0 %v480
        %v482 = vand.u32 %v235, 4294901760
        %v483 = vsub.f32 %v235, %v482
        %v484 = vand.u32 %v483, 4294901760
        %485 = vmatpush.msra.mxu0 %v484
        %v486 = vand.u32 %v231, 4294901760
        %v487 = vsub.f32 %v231, %v486
        %v488 = vand.u32 %v487, 4294901760
        %489 = vmatpush.msra.mxu0 %v488
        %v490 = vand.u32 %v227, 4294901760
        %v491 = vsub.f32 %v227, %v490
        %v492 = vand.u32 %v491, 4294901760
        %493 = vmatpush.msra.mxu0 %v492
        %v494 = vand.u32 %v223, 4294901760
        %v495 = vsub.f32 %v223, %v494
        %v496 = vand.u32 %v495, 4294901760
        %497 = vmatpush.msra.mxu0 %v496
        %v498 = vand.u32 %v219, 4294901760
        %v499 = vsub.f32 %v219, %v498
        %v500 = vand.u32 %v499, 4294901760
        %501 = vmatpush.msra.mxu0 %v500
        %v502 = vand.u32 %v215, 4294901760
        %v503 = vsub.f32 %v215, %v502
        %v504 = vand.u32 %v503, 4294901760
        %505 = vmatpush.msra.mxu0 %v504
        %v506 = vand.u32 %v211, 4294901760
        %v507 = vsub.f32 %v211, %v506
        %v508 = vand.u32 %v507, 4294901760
        %509 = vmatpush.msra.mxu0 %v508
        %v510 = vand.u32 %v207, 4294901760
        %v511 = vsub.f32 %v207, %v510
        %v512 = vand.u32 %v511, 4294901760
        %513 = vmatpush.msra.mxu0 %v512
        %v514 = vand.u32 %v203, 4294901760
        %v515 = vsub.f32 %v203, %v514
        %v516 = vand.u32 %v515, 4294901760
        %517 = vmatpush.msra.mxu0 %v516
        %v518 = vand.u32 %v199, 4294901760
        %v519 = vsub.f32 %v199, %v518
        %v520 = vand.u32 %v519, 4294901760
        %521 = vmatpush.msra.mxu0 %v520
        %v522 = vand.u32 %v195, 4294901760
        %v523 = vsub.f32 %v195, %v522
        %v524 = vand.u32 %v523, 4294901760
        %525 = vmatpush.msra.mxu0 %v524
        %v526 = vand.u32 %v191, 4294901760
        %v527 = vsub.f32 %v191, %v526
        %v528 = vand.u32 %v527, 4294901760
        %529 = vmatpush.msra.mxu0 %v528
        %v530 = vand.u32 %v187, 4294901760
        %v531 = vsub.f32 %v187, %v530
        %v532 = vand.u32 %v531, 4294901760
        %533 = vmatpush.msra.mxu0 %v532
        %v534 = vand.u32 %v183, 4294901760
        %v535 = vsub.f32 %v183, %v534
        %v536 = vand.u32 %v535, 4294901760
        %537 = vmatpush.msra.mxu0 %v536
        %v538 = vand.u32 %v179, 4294901760
        %v539 = vsub.f32 %v179, %v538
        %v540 = vand.u32 %v539, 4294901760
        %541 = vmatpush.msra.mxu0 %v540
        %v542 = vand.u32 %v178, 4294901760
        %543 = vmatmul.f32.gmra.mxu0 %v542
        %v544 = vpop.f32.mrf.mxu0
        %v545 = vadd.f32 %v476, %v544
        %546 = vdwg.mxu0
        %v547 = vand.u32 %v239, 4294901760
        %548 = vmatpush.msra.mxu0 %v547
        %v549 = vand.u32 %v235, 4294901760
        %550 = vmatpush.msra.mxu0 %v549
        %v551 = vand.u32 %v231, 4294901760
        %552 = vmatpush.msra.mxu0 %v551
        %v553 = vand.u32 %v227, 4294901760
        %554 = vmatpush.msra.mxu0 %v553
        %v555 = vand.u32 %v223, 4294901760
        %556 = vmatpush.msra.mxu0 %v555
        %v557 = vand.u32 %v219, 4294901760
        %558 = vmatpush.msra.mxu0 %v557
        %v559 = vand.u32 %v215, 4294901760
        %560 = vmatpush.msra.mxu0 %v559
        %v561 = vand.u32 %v211, 4294901760
        %562 = vmatpush.msra.mxu0 %v561
        %v563 = vand.u32 %v207, 4294901760
        %564 = vmatpush.msra.mxu0 %v563
        %v565 = vand.u32 %v203, 4294901760
        %566 = vmatpush.msra.mxu0 %v565
        %v567 = vand.u32 %v199, 4294901760
        %568 = vmatpush.msra.mxu0 %v567
        %v569 = vand.u32 %v195, 4294901760
        %570 = vmatpush.msra.mxu0 %v569
        %v571 = vand.u32 %v191, 4294901760
        %572 = vmatpush.msra.mxu0 %v571
        %v573 = vand.u32 %v187, 4294901760
        %574 = vmatpush.msra.mxu0 %v573
        %v575 = vand.u32 %v183, 4294901760
        %576 = vmatpush.msra.mxu0 %v575
        %v577 = vand.u32 %v179, 4294901760
        %578 = vmatpush.msra.mxu0 %v577
        %v579 = vand.u32 %v178, 4294901760
        %580 = vmatmul.f32.gmra.mxu0 %v579
        %v581 = vpop.f32.mrf.mxu0
        %v582 = vadd.f32 %v545, %v581
        %583 = vdwg.mxu0
        %v584 = vand.u32 %v240, 4294901760
        %585 = vmatpush.msra.mxu0 %v584
        %v586 = vand.u32 %v236, 4294901760
        %587 = vmatpush.msra.mxu0 %v586
        %v588 = vand.u32 %v232, 4294901760
        %589 = vmatpush.msra.mxu0 %v588
        %v590 = vand.u32 %v228, 4294901760
        %591 = vmatpush.msra.mxu0 %v590
        %v592 = vand.u32 %v224, 4294901760
        %593 = vmatpush.msra.mxu0 %v592
        %v594 = vand.u32 %v220, 4294901760
        %595 = vmatpush.msra.mxu0 %v594
        %v596 = vand.u32 %v216, 4294901760
        %597 = vmatpush.msra.mxu0 %v596
        %v598 = vand.u32 %v212, 4294901760
        %599 = vmatpush.msra.mxu0 %v598
        %v600 = vand.u32 %v208, 4294901760
        %601 = vmatpush.msra.mxu0 %v600
        %v602 = vand.u32 %v204, 4294901760
        %603 = vmatpush.msra.mxu0 %v602
        %v604 = vand.u32 %v200, 4294901760
        %605 = vmatpush.msra.mxu0 %v604
        %v606 = vand.u32 %v196, 4294901760
        %607 = vmatpush.msra.mxu0 %v606
        %v608 = vand.u32 %v192, 4294901760
        %609 = vmatpush.msra.mxu0 %v608
        %v610 = vand.u32 %v188, 4294901760
        %611 = vmatpush.msra.mxu0 %v610
        %v612 = vand.u32 %v184, 4294901760
        %613 = vmatpush.msra.mxu0 %v612
        %v614 = vand.u32 %v180, 4294901760
        %615 = vmatpush.msra.mxu0 %v614
        %v616 = vand.u32 %v178, 4294901760
        %v617 = vsub.f32 %v178, %v616
        %v618 = vand.u32 %v617, 4294901760
        %v619 = vsub.f32 %v617, %v618
        %v620 = vand.u32 %v619, 4294901760
        %621 = vmatmul.f32.gmra.mxu0 %v620
        %v622 = vpop.f32.mrf.mxu0
        %v623 = vadd.f32 0.0, %v622
        %624 = vdwg.mxu0
        %v625 = vand.u32 %v240, 4294901760
        %v626 = vsub.f32 %v240, %v625
        %v627 = vand.u32 %v626, 4294901760
        %v628 = vsub.f32 %v626, %v627
        %v629 = vand.u32 %v628, 4294901760
        %630 = vmatpush.msra.mxu0 %v629
        %v631 = vand.u32 %v236, 4294901760
        %v632 = vsub.f32 %v236, %v631
        %v633 = vand.u32 %v632, 4294901760
        %v634 = vsub.f32 %v632, %v633
        %v635 = vand.u32 %v634, 4294901760
        %636 = vmatpush.msra.mxu0 %v635
        %v637 = vand.u32 %v232, 4294901760
        %v638 = vsub.f32 %v232, %v637
        %v639 = vand.u32 %v638, 4294901760
        %v640 = vsub.f32 %v638, %v639
        %v641 = vand.u32 %v640, 4294901760
        %642 = vmatpush.msra.mxu0 %v641
        %v643 = vand.u32 %v228, 4294901760
        %v644 = vsub.f32 %v228, %v643
        %v645 = vand.u32 %v644, 4294901760
        %v646 = vsub.f32 %v644, %v645
        %v647 = vand.u32 %v646, 4294901760
        %648 = vmatpush.msra.mxu0 %v647
        %v649 = vand.u32 %v224, 4294901760
        %v650 = vsub.f32 %v224, %v649
        %v651 = vand.u32 %v650, 4294901760
        %v652 = vsub.f32 %v650, %v651
        %v653 = vand.u32 %v652, 4294901760
        %654 = vmatpush.msra.mxu0 %v653
        %v655 = vand.u32 %v220, 4294901760
        %v656 = vsub.f32 %v220, %v655
        %v657 = vand.u32 %v656, 4294901760
        %v658 = vsub.f32 %v656, %v657
        %v659 = vand.u32 %v658, 4294901760
        %660 = vmatpush.msra.mxu0 %v659
        %v661 = vand.u32 %v216, 4294901760
        %v662 = vsub.f32 %v216, %v661
        %v663 = vand.u32 %v662, 4294901760
        %v664 = vsub.f32 %v662, %v663
        %v665 = vand.u32 %v664, 4294901760
        %666 = vmatpush.msra.mxu0 %v665
        %v667 = vand.u32 %v212, 4294901760
        %v668 = vsub.f32 %v212, %v667
        %v669 = vand.u32 %v668, 4294901760
        %v670 = vsub.f32 %v668, %v669
        %v671 = vand.u32 %v670, 4294901760
        %672 = vmatpush.msra.mxu0 %v671
        %v673 = vand.u32 %v208, 4294901760
        %v674 = vsub.f32 %v208, %v673
        %v675 = vand.u32 %v674, 4294901760
        %v676 = vsub.f32 %v674, %v675
        %v677 = vand.u32 %v676, 4294901760
        %678 = vmatpush.msra.mxu0 %v677
        %v679 = vand.u32 %v204, 4294901760
        %v680 = vsub.f32 %v204, %v679
        %v681 = vand.u32 %v680, 4294901760
        %v682 = vsub.f32 %v680, %v681
        %v683 = vand.u32 %v682, 4294901760
        %684 = vmatpush.msra.mxu0 %v683
        %v685 = vand.u32 %v200, 4294901760
        %v686 = vsub.f32 %v200, %v685
        %v687 = vand.u32 %v686, 4294901760
        %v688 = vsub.f32 %v686, %v687
        %v689 = vand.u32 %v688, 4294901760
        %690 = vmatpush.msra.mxu0 %v689
        %v691 = vand.u32 %v196, 4294901760
        %v692 = vsub.f32 %v196, %v691
        %v693 = vand.u32 %v692, 4294901760
        %v694 = vsub.f32 %v692, %v693
        %v695 = vand.u32 %v694, 4294901760
        %696 = vmatpush.msra.mxu0 %v695
        %v697 = vand.u32 %v192, 4294901760
        %v698 = vsub.f32 %v192, %v697
        %v699 = vand.u32 %v698, 4294901760
        %v700 = vsub.f32 %v698, %v699
        %v701 = vand.u32 %v700, 4294901760
        %702 = vmatpush.msra.mxu0 %v701
        %v703 = vand.u32 %v188, 4294901760
        %v704 = vsub.f32 %v188, %v703
        %v705 = vand.u32 %v704, 4294901760
        %v706 = vsub.f32 %v704, %v705
        %v707 = vand.u32 %v706, 4294901760
        %708 = vmatpush.msra.mxu0 %v707
        %v709 = vand.u32 %v184, 4294901760
        %v710 = vsub.f32 %v184, %v709
        %v711 = vand.u32 %v710, 4294901760
        %v712 = vsub.f32 %v710, %v711
        %v713 = vand.u32 %v712, 4294901760
        %714 = vmatpush.msra.mxu0 %v713
        %v715 = vand.u32 %v180, 4294901760
        %v716 = vsub.f32 %v180, %v715
        %v717 = vand.u32 %v716, 4294901760
        %v718 = vsub.f32 %v716, %v717
        %v719 = vand.u32 %v718, 4294901760
        %720 = vmatpush.msra.mxu0 %v719
        %v721 = vand.u32 %v178, 4294901760
        %722 = vmatmul.f32.gmra.mxu0 %v721
        %v723 = vpop.f32.mrf.mxu0
        %v724 = vadd.f32 %v623, %v723
        %725 = vdwg.mxu0
        %v726 = vand.u32 %v240, 4294901760
        %v727 = vsub.f32 %v240, %v726
        %728 = vmatpush.msra.mxu0 %v727
        %v729 = vand.u32 %v236, 4294901760
        %v730 = vsub.f32 %v236, %v729
        %731 = vmatpush.msra.mxu0 %v730
        %v732 = vand.u32 %v232, 4294901760
        %v733 = vsub.f32 %v232, %v732
        %734 = vmatpush.msra.mxu0 %v733
        %v735 = vand.u32 %v228, 4294901760
        %v736 = vsub.f32 %v228, %v735
        %737 = vmatpush.msra.mxu0 %v736
        %v738 = vand.u32 %v224, 4294901760
        %v739 = vsub.f32 %v224, %v738
        %740 = vmatpush.msra.mxu0 %v739
        %v741 = vand.u32 %v220, 4294901760
        %v742 = vsub.f32 %v220, %v741
        %743 = vmatpush.msra.mxu0 %v742
        %v744 = vand.u32 %v216, 4294901760
        %v745 = vsub.f32 %v216, %v744
        %746 = vmatpush.msra.mxu0 %v745
        %v747 = vand.u32 %v212, 4294901760
        %v748 = vsub.f32 %v212, %v747
        %749 = vmatpush.msra.mxu0 %v748
        %v750 = vand.u32 %v208, 4294901760
        %v751 = vsub.f32 %v208, %v750
        %752 = vmatpush.msra.mxu0 %v751
        %v753 = vand.u32 %v204, 4294901760
        %v754 = vsub.f32 %v204, %v753
        %755 = vmatpush.msra.mxu0 %v754
        %v756 = vand.u32 %v200, 4294901760
        %v757 = vsub.f32 %v200, %v756
        %758 = vmatpush.msra.mxu0 %v757
        %v759 = vand.u32 %v196, 4294901760
        %v760 = vsub.f32 %v196, %v759
        %761 = vmatpush.msra.mxu0 %v760
        %v762 = vand.u32 %v192, 4294901760
        %v763 = vsub.f32 %v192, %v762
        %764 = vmatpush.msra.mxu0 %v763
        %v765 = vand.u32 %v188, 4294901760
        %v766 = vsub.f32 %v188, %v765
        %767 = vmatpush.msra.mxu0 %v766
        %v768 = vand.u32 %v184, 4294901760
        %v769 = vsub.f32 %v184, %v768
        %770 = vmatpush.msra.mxu0 %v769
        %v771 = vand.u32 %v180, 4294901760
        %v772 = vsub.f32 %v180, %v771
        %773 = vmatpush.msra.mxu0 %v772
        %v774 = vand.u32 %v178, 4294901760
        %v775 = vsub.f32 %v178, %v774
        %776 = vmatmul.f32.gmra.mxu0 %v775
        %v777 = vpop.f32.mrf.mxu0
        %v778 = vadd.f32 %v724, %v777
        %779 = vdwg.mxu0
        %v780 = vand.u32 %v240, 4294901760
        %781 = vmatpush.msra.mxu0 %v780
        %v782 = vand.u32 %v236, 4294901760
        %783 = vmatpush.msra.mxu0 %v782
        %v784 = vand.u32 %v232, 4294901760
        %785 = vmatpush.msra.mxu0 %v784
        %v786 = vand.u32 %v228, 4294901760
        %787 = vmatpush.msra.mxu0 %v786
        %v788 = vand.u32 %v224, 4294901760
        %789 = vmatpush.msra.mxu0 %v788
        %v790 = vand.u32 %v220, 4294901760
        %791 = vmatpush.msra.mxu0 %v790
        %v792 = vand.u32 %v216, 4294901760
        %793 = vmatpush.msra.mxu0 %v792
        %v794 = vand.u32 %v212, 4294901760
        %795 = vmatpush.msra.mxu0 %v794
        %v796 = vand.u32 %v208, 4294901760
        %797 = vmatpush.msra.mxu0 %v796
        %v798 = vand.u32 %v204, 4294901760
        %799 = vmatpush.msra.mxu0 %v798
        %v800 = vand.u32 %v200, 4294901760
        %801 = vmatpush.msra.mxu0 %v800
        %v802 = vand.u32 %v196, 4294901760
        %803 = vmatpush.msra.mxu0 %v802
        %v804 = vand.u32 %v192, 4294901760
        %805 = vmatpush.msra.mxu0 %v804
        %v806 = vand.u32 %v188, 4294901760
        %807 = vmatpush.msra.mxu0 %v806
        %v808 = vand.u32 %v184, 4294901760
        %809 = vmatpush.msra.mxu0 %v808
        %v810 = vand.u32 %v180, 4294901760
        %811 = vmatpush.msra.mxu0 %v810
        %v812 = vand.u32 %v178, 4294901760
        %v813 = vsub.f32 %v178, %v812
        %v814 = vand.u32 %v813, 4294901760
        %815 = vmatmul.f32.gmra.mxu0 %v814
        %v816 = vpop.f32.mrf.mxu0
        %v817 = vadd.f32 %v778, %v816
        %818 = vdwg.mxu0
        %v819 = vand.u32 %v240, 4294901760
        %v820 = vsub.f32 %v240, %v819
        %v821 = vand.u32 %v820, 4294901760
        %822 = vmatpush.msra.mxu0 %v821
        %v823 = vand.u32 %v236, 4294901760
        %v824 = vsub.f32 %v236, %v823
        %v825 = vand.u32 %v824, 4294901760
        %826 = vmatpush.msra.mxu0 %v825
        %v827 = vand.u32 %v232, 4294901760
        %v828 = vsub.f32 %v232, %v827
        %v829 = vand.u32 %v828, 4294901760
        %830 = vmatpush.msra.mxu0 %v829
        %v831 = vand.u32 %v228, 4294901760
        %v832 = vsub.f32 %v228, %v831
        %v833 = vand.u32 %v832, 4294901760
        %834 = vmatpush.msra.mxu0 %v833
        %v835 = vand.u32 %v224, 4294901760
        %v836 = vsub.f32 %v224, %v835
        %v837 = vand.u32 %v836, 4294901760
        %838 = vmatpush.msra.mxu0 %v837
        %v839 = vand.u32 %v220, 4294901760
        %v840 = vsub.f32 %v220, %v839
        %v841 = vand.u32 %v840, 4294901760
        %842 = vmatpush.msra.mxu0 %v841
        %v843 = vand.u32 %v216, 4294901760
        %v844 = vsub.f32 %v216, %v843
        %v845 = vand.u32 %v844, 4294901760
        %846 = vmatpush.msra.mxu0 %v845
        %v847 = vand.u32 %v212, 4294901760
        %v848 = vsub.f32 %v212, %v847
        %v849 = vand.u32 %v848, 4294901760
        %850 = vmatpush.msra.mxu0 %v849
        %v851 = vand.u32 %v208, 4294901760
        %v852 = vsub.f32 %v208, %v851
        %v853 = vand.u32 %v852, 4294901760
        %854 = vmatpush.msra.mxu0 %v853
        %v855 = vand.u32 %v204, 4294901760
        %v856 = vsub.f32 %v204, %v855
        %v857 = vand.u32 %v856, 4294901760
        %858 = vmatpush.msra.mxu0 %v857
        %v859 = vand.u32 %v200, 4294901760
        %v860 = vsub.f32 %v200, %v859
        %v861 = vand.u32 %v860, 4294901760
        %862 = vmatpush.msra.mxu0 %v861
        %v863 = vand.u32 %v196, 4294901760
        %v864 = vsub.f32 %v196, %v863
        %v865 = vand.u32 %v864, 4294901760
        %866 = vmatpush.msra.mxu0 %v865
        %v867 = vand.u32 %v192, 4294901760
        %v868 = vsub.f32 %v192, %v867
        %v869 = vand.u32 %v868, 4294901760
        %870 = vmatpush.msra.mxu0 %v869
        %v871 = vand.u32 %v188, 4294901760
        %v872 = vsub.f32 %v188, %v871
        %v873 = vand.u32 %v872, 4294901760
        %874 = vmatpush.msra.mxu0 %v873
        %v875 = vand.u32 %v184, 4294901760
        %v876 = vsub.f32 %v184, %v875
        %v877 = vand.u32 %v876, 4294901760
        %878 = vmatpush.msra.mxu0 %v877
        %v879 = vand.u32 %v180, 4294901760
        %v880 = vsub.f32 %v180, %v879
        %v881 = vand.u32 %v880, 4294901760
        %882 = vmatpush.msra.mxu0 %v881
        %v883 = vand.u32 %v178, 4294901760
        %884 = vmatmul.f32.gmra.mxu0 %v883
        %v885 = vpop.f32.mrf.mxu0
        %v886 = vadd.f32 %v817, %v885
        %887 = vdwg.mxu0
        %v888 = vand.u32 %v240, 4294901760
        %889 = vmatpush.msra.mxu0 %v888
        %v890 = vand.u32 %v236, 4294901760
        %891 = vmatpush.msra.mxu0 %v890
        %v892 = vand.u32 %v232, 4294901760
        %893 = vmatpush.msra.mxu0 %v892
        %v894 = vand.u32 %v228, 4294901760
        %895 = vmatpush.msra.mxu0 %v894
        %v896 = vand.u32 %v224, 4294901760
        %897 = vmatpush.msra.mxu0 %v896
        %v898 = vand.u32 %v220, 4294901760
        %899 = vmatpush.msra.mxu0 %v898
        %v900 = vand.u32 %v216, 4294901760
        %901 = vmatpush.msra.mxu0 %v900
        %v902 = vand.u32 %v212, 4294901760
        %903 = vmatpush.msra.mxu0 %v902
        %v904 = vand.u32 %v208, 4294901760
        %905 = vmatpush.msra.mxu0 %v904
        %v906 = vand.u32 %v204, 4294901760
        %907 = vmatpush.msra.mxu0 %v906
        %v908 = vand.u32 %v200, 4294901760
        %909 = vmatpush.msra.mxu0 %v908
        %v910 = vand.u32 %v196, 4294901760
        %911 = vmatpush.msra.mxu0 %v910
        %v912 = vand.u32 %v192, 4294901760
        %913 = vmatpush.msra.mxu0 %v912
        %v914 = vand.u32 %v188, 4294901760
        %915 = vmatpush.msra.mxu0 %v914
        %v916 = vand.u32 %v184, 4294901760
        %917 = vmatpush.msra.mxu0 %v916
        %v918 = vand.u32 %v180, 4294901760
        %919 = vmatpush.msra.mxu0 %v918
        %v920 = vand.u32 %v178, 4294901760
        %921 = vmatmul.f32.gmra.mxu0 %v920
        %v922 = vpop.f32.mrf.mxu0
        %v923 = vadd.f32 %v886, %v922
        %924 = vdwg.mxu0
        %v925 = vand.u32 %v241, 4294901760
        %926 = vmatpush.msra.mxu0 %v925
        %v927 = vand.u32 %v237, 4294901760
        %928 = vmatpush.msra.mxu0 %v927
        %v929 = vand.u32 %v233, 4294901760
        %930 = vmatpush.msra.mxu0 %v929
        %v931 = vand.u32 %v229, 4294901760
        %932 = vmatpush.msra.mxu0 %v931
        %v933 = vand.u32 %v225, 4294901760
        %934 = vmatpush.msra.mxu0 %v933
        %v935 = vand.u32 %v221, 4294901760
        %936 = vmatpush.msra.mxu0 %v935
        %v937 = vand.u32 %v217, 4294901760
        %938 = vmatpush.msra.mxu0 %v937
        %v939 = vand.u32 %v213, 4294901760
        %940 = vmatpush.msra.mxu0 %v939
        %v941 = vand.u32 %v209, 4294901760
        %942 = vmatpush.msra.mxu0 %v941
        %v943 = vand.u32 %v205, 4294901760
        %944 = vmatpush.msra.mxu0 %v943
        %v945 = vand.u32 %v201, 4294901760
        %946 = vmatpush.msra.mxu0 %v945
        %v947 = vand.u32 %v197, 4294901760
        %948 = vmatpush.msra.mxu0 %v947
        %v949 = vand.u32 %v193, 4294901760
        %950 = vmatpush.msra.mxu0 %v949
        %v951 = vand.u32 %v189, 4294901760
        %952 = vmatpush.msra.mxu0 %v951
        %v953 = vand.u32 %v185, 4294901760
        %954 = vmatpush.msra.mxu0 %v953
        %v955 = vand.u32 %v181, 4294901760
        %956 = vmatpush.msra.mxu0 %v955
        %v957 = vand.u32 %v178, 4294901760
        %v958 = vsub.f32 %v178, %v957
        %v959 = vand.u32 %v958, 4294901760
        %v960 = vsub.f32 %v958, %v959
        %v961 = vand.u32 %v960, 4294901760
        %962 = vmatmul.f32.gmra.mxu0 %v961
        %v963 = vpop.f32.mrf.mxu0
        %v964 = vadd.f32 0.0, %v963
        %965 = vdwg.mxu0
        %v966 = vand.u32 %v241, 4294901760
        %v967 = vsub.f32 %v241, %v966
        %v968 = vand.u32 %v967, 4294901760
        %v969 = vsub.f32 %v967, %v968
        %v970 = vand.u32 %v969, 4294901760
        %971 = vmatpush.msra.mxu0 %v970
        %v972 = vand.u32 %v237, 4294901760
        %v973 = vsub.f32 %v237, %v972
        %v974 = vand.u32 %v973, 4294901760
        %v975 = vsub.f32 %v973, %v974
        %v976 = vand.u32 %v975, 4294901760
        %977 = vmatpush.msra.mxu0 %v976
        %v978 = vand.u32 %v233, 4294901760
        %v979 = vsub.f32 %v233, %v978
        %v980 = vand.u32 %v979, 4294901760
        %v981 = vsub.f32 %v979, %v980
        %v982 = vand.u32 %v981, 4294901760
        %983 = vmatpush.msra.mxu0 %v982
        %v984 = vand.u32 %v229, 4294901760
        %v985 = vsub.f32 %v229, %v984
        %v986 = vand.u32 %v985, 4294901760
        %v987 = vsub.f32 %v985, %v986
        %v988 = vand.u32 %v987, 4294901760
        %989 = vmatpush.msra.mxu0 %v988
        %v990 = vand.u32 %v225, 4294901760
        %v991 = vsub.f32 %v225, %v990
        %v992 = vand.u32 %v991, 4294901760
        %v993 = vsub.f32 %v991, %v992
        %v994 = vand.u32 %v993, 4294901760
        %995 = vmatpush.msra.mxu0 %v994
        %v996 = vand.u32 %v221, 4294901760
        %v997 = vsub.f32 %v221, %v996
        %v998 = vand.u32 %v997, 4294901760
        %v999 = vsub.f32 %v997, %v998
        %v1000 = vand.u32 %v999, 4294901760
        %1001 = vmatpush.msra.mxu0 %v1000
        %v1002 = vand.u32 %v217, 4294901760
        %v1003 = vsub.f32 %v217, %v1002
        %v1004 = vand.u32 %v1003, 4294901760
        %v1005 = vsub.f32 %v1003, %v1004
        %v1006 = vand.u32 %v1005, 4294901760
        %1007 = vmatpush.msra.mxu0 %v1006
        %v1008 = vand.u32 %v213, 4294901760
        %v1009 = vsub.f32 %v213, %v1008
        %v1010 = vand.u32 %v1009, 4294901760
        %v1011 = vsub.f32 %v1009, %v1010
        %v1012 = vand.u32 %v1011, 4294901760
        %1013 = vmatpush.msra.mxu0 %v1012
        %v1014 = vand.u32 %v209, 4294901760
        %v1015 = vsub.f32 %v209, %v1014
        %v1016 = vand.u32 %v1015, 4294901760
        %v1017 = vsub.f32 %v1015, %v1016
        %v1018 = vand.u32 %v1017, 4294901760
        %1019 = vmatpush.msra.mxu0 %v1018
        %v1020 = vand.u32 %v205, 4294901760
        %v1021 = vsub.f32 %v205, %v1020
        %v1022 = vand.u32 %v1021, 4294901760
        %v1023 = vsub.f32 %v1021, %v1022
        %v1024 = vand.u32 %v1023, 4294901760
        %1025 = vmatpush.msra.mxu0 %v1024
        %v1026 = vand.u32 %v201, 4294901760
        %v1027 = vsub.f32 %v201, %v1026
        %v1028 = vand.u32 %v1027, 4294901760
        %v1029 = vsub.f32 %v1027, %v1028
        %v1030 = vand.u32 %v1029, 4294901760
        %1031 = vmatpush.msra.mxu0 %v1030
        %v1032 = vand.u32 %v197, 4294901760
        %v1033 = vsub.f32 %v197, %v1032
        %v1034 = vand.u32 %v1033, 4294901760
        %v1035 = vsub.f32 %v1033, %v1034
        %v1036 = vand.u32 %v1035, 4294901760
        %1037 = vmatpush.msra.mxu0 %v1036
        %v1038 = vand.u32 %v193, 4294901760
        %v1039 = vsub.f32 %v193, %v1038
        %v1040 = vand.u32 %v1039, 4294901760
        %v1041 = vsub.f32 %v1039, %v1040
        %v1042 = vand.u32 %v1041, 4294901760
        %1043 = vmatpush.msra.mxu0 %v1042
        %v1044 = vand.u32 %v189, 4294901760
        %v1045 = vsub.f32 %v189, %v1044
        %v1046 = vand.u32 %v1045, 4294901760
        %v1047 = vsub.f32 %v1045, %v1046
        %v1048 = vand.u32 %v1047, 4294901760
        %1049 = vmatpush.msra.mxu0 %v1048
        %v1050 = vand.u32 %v185, 4294901760
        %v1051 = vsub.f32 %v185, %v1050
        %v1052 = vand.u32 %v1051, 4294901760
        %v1053 = vsub.f32 %v1051, %v1052
        %v1054 = vand.u32 %v1053, 4294901760
        %1055 = vmatpush.msra.mxu0 %v1054
        %v1056 = vand.u32 %v181, 4294901760
        %v1057 = vsub.f32 %v181, %v1056
        %v1058 = vand.u32 %v1057, 4294901760
        %v1059 = vsub.f32 %v1057, %v1058
        %v1060 = vand.u32 %v1059, 4294901760
        %1061 = vmatpush.msra.mxu0 %v1060
        %v1062 = vand.u32 %v178, 4294901760
        %1063 = vmatmul.f32.gmra.mxu0 %v1062
        %v1064 = vpop.f32.mrf.mxu0
        %v1065 = vadd.f32 %v964, %v1064
        %1066 = vdwg.mxu0
        %v1067 = vand.u32 %v241, 4294901760
        %v1068 = vsub.f32 %v241, %v1067
        %1069 = vmatpush.msra.mxu0 %v1068
        %v1070 = vand.u32 %v237, 4294901760
        %v1071 = vsub.f32 %v237, %v1070
        %1072 = vmatpush.msra.mxu0 %v1071
        %v1073 = vand.u32 %v233, 4294901760
        %v1074 = vsub.f32 %v233, %v1073
        %1075 = vmatpush.msra.mxu0 %v1074
        %v1076 = vand.u32 %v229, 4294901760
        %v1077 = vsub.f32 %v229, %v1076
        %1078 = vmatpush.msra.mxu0 %v1077
        %v1079 = vand.u32 %v225, 4294901760
        %v1080 = vsub.f32 %v225, %v1079
        %1081 = vmatpush.msra.mxu0 %v1080
        %v1082 = vand.u32 %v221, 4294901760
        %v1083 = vsub.f32 %v221, %v1082
        %1084 = vmatpush.msra.mxu0 %v1083
        %v1085 = vand.u32 %v217, 4294901760
        %v1086 = vsub.f32 %v217, %v1085
        %1087 = vmatpush.msra.mxu0 %v1086
        %v1088 = vand.u32 %v213, 4294901760
        %v1089 = vsub.f32 %v213, %v1088
        %1090 = vmatpush.msra.mxu0 %v1089
        %v1091 = vand.u32 %v209, 4294901760
        %v1092 = vsub.f32 %v209, %v1091
        %1093 = vmatpush.msra.mxu0 %v1092
        %v1094 = vand.u32 %v205, 4294901760
        %v1095 = vsub.f32 %v205, %v1094
        %1096 = vmatpush.msra.mxu0 %v1095
        %v1097 = vand.u32 %v201, 4294901760
        %v1098 = vsub.f32 %v201, %v1097
        %1099 = vmatpush.msra.mxu0 %v1098
        %v1100 = vand.u32 %v197, 4294901760
        %v1101 = vsub.f32 %v197, %v1100
        %1102 = vmatpush.msra.mxu0 %v1101
        %v1103 = vand.u32 %v193, 4294901760
        %v1104 = vsub.f32 %v193, %v1103
        %1105 = vmatpush.msra.mxu0 %v1104
        %v1106 = vand.u32 %v189, 4294901760
        %v1107 = vsub.f32 %v189, %v1106
        %1108 = vmatpush.msra.mxu0 %v1107
        %v1109 = vand.u32 %v185, 4294901760
        %v1110 = vsub.f32 %v185, %v1109
        %1111 = vmatpush.msra.mxu0 %v1110
        %v1112 = vand.u32 %v181, 4294901760
        %v1113 = vsub.f32 %v181, %v1112
        %1114 = vmatpush.msra.mxu0 %v1113
        %v1115 = vand.u32 %v178, 4294901760
        %v1116 = vsub.f32 %v178, %v1115
        %1117 = vmatmul.f32.gmra.mxu0 %v1116
        %v1118 = vpop.f32.mrf.mxu0
        %v1119 = vadd.f32 %v1065, %v1118
        %1120 = vdwg.mxu0
        %v1121 = vand.u32 %v241, 4294901760
        %1122 = vmatpush.msra.mxu0 %v1121
        %v1123 = vand.u32 %v237, 4294901760
        %1124 = vmatpush.msra.mxu0 %v1123
        %v1125 = vand.u32 %v233, 4294901760
        %1126 = vmatpush.msra.mxu0 %v1125
        %v1127 = vand.u32 %v229, 4294901760
        %1128 = vmatpush.msra.mxu0 %v1127
        %v1129 = vand.u32 %v225, 4294901760
        %1130 = vmatpush.msra.mxu0 %v1129
        %v1131 = vand.u32 %v221, 4294901760
        %1132 = vmatpush.msra.mxu0 %v1131
        %v1133 = vand.u32 %v217, 4294901760
        %1134 = vmatpush.msra.mxu0 %v1133
        %v1135 = vand.u32 %v213, 4294901760
        %1136 = vmatpush.msra.mxu0 %v1135
        %v1137 = vand.u32 %v209, 4294901760
        %1138 = vmatpush.msra.mxu0 %v1137
        %v1139 = vand.u32 %v205, 4294901760
        %1140 = vmatpush.msra.mxu0 %v1139
        %v1141 = vand.u32 %v201, 4294901760
        %1142 = vmatpush.msra.mxu0 %v1141
        %v1143 = vand.u32 %v197, 4294901760
        %1144 = vmatpush.msra.mxu0 %v1143
        %v1145 = vand.u32 %v193, 4294901760
        %1146 = vmatpush.msra.mxu0 %v1145
        %v1147 = vand.u32 %v189, 4294901760
        %1148 = vmatpush.msra.mxu0 %v1147
        %v1149 = vand.u32 %v185, 4294901760
        %1150 = vmatpush.msra.mxu0 %v1149
        %v1151 = vand.u32 %v181, 4294901760
        %1152 = vmatpush.msra.mxu0 %v1151
        %v1153 = vand.u32 %v178, 4294901760
        %v1154 = vsub.f32 %v178, %v1153
        %v1155 = vand.u32 %v1154, 4294901760
        %1156 = vmatmul.f32.gmra.mxu0 %v1155
        %v1157 = vpop.f32.mrf.mxu0
        %v1158 = vadd.f32 %v1119, %v1157
        %1159 = vdwg.mxu0
        %v1160 = vand.u32 %v241, 4294901760
        %v1161 = vsub.f32 %v241, %v1160
        %v1162 = vand.u32 %v1161, 4294901760
        %1163 = vmatpush.msra.mxu0 %v1162
        %v1164 = vand.u32 %v237, 4294901760
        %v1165 = vsub.f32 %v237, %v1164
        %v1166 = vand.u32 %v1165, 4294901760
        %1167 = vmatpush.msra.mxu0 %v1166
        %v1168 = vand.u32 %v233, 4294901760
        %v1169 = vsub.f32 %v233, %v1168
        %v1170 = vand.u32 %v1169, 4294901760
        %1171 = vmatpush.msra.mxu0 %v1170
        %v1172 = vand.u32 %v229, 4294901760
        %v1173 = vsub.f32 %v229, %v1172
        %v1174 = vand.u32 %v1173, 4294901760
        %1175 = vmatpush.msra.mxu0 %v1174
        %v1176 = vand.u32 %v225, 4294901760
        %v1177 = vsub.f32 %v225, %v1176
        %v1178 = vand.u32 %v1177, 4294901760
        %1179 = vmatpush.msra.mxu0 %v1178
        %v1180 = vand.u32 %v221, 4294901760
        %v1181 = vsub.f32 %v221, %v1180
        %v1182 = vand.u32 %v1181, 4294901760
        %1183 = vmatpush.msra.mxu0 %v1182
        %v1184 = vand.u32 %v217, 4294901760
        %v1185 = vsub.f32 %v217, %v1184
        %v1186 = vand.u32 %v1185, 4294901760
        %1187 = vmatpush.msra.mxu0 %v1186
        %v1188 = vand.u32 %v213, 4294901760
        %v1189 = vsub.f32 %v213, %v1188
        %v1190 = vand.u32 %v1189, 4294901760
        %1191 = vmatpush.msra.mxu0 %v1190
        %v1192 = vand.u32 %v209, 4294901760
        %v1193 = vsub.f32 %v209, %v1192
        %v1194 = vand.u32 %v1193, 4294901760
        %1195 = vmatpush.msra.mxu0 %v1194
        %v1196 = vand.u32 %v205, 4294901760
        %v1197 = vsub.f32 %v205, %v1196
        %v1198 = vand.u32 %v1197, 4294901760
        %1199 = vmatpush.msra.mxu0 %v1198
        %v1200 = vand.u32 %v201, 4294901760
        %v1201 = vsub.f32 %v201, %v1200
        %v1202 = vand.u32 %v1201, 4294901760
        %1203 = vmatpush.msra.mxu0 %v1202
        %v1204 = vand.u32 %v197, 4294901760
        %v1205 = vsub.f32 %v197, %v1204
        %v1206 = vand.u32 %v1205, 4294901760
        %1207 = vmatpush.msra.mxu0 %v1206
        %v1208 = vand.u32 %v193, 4294901760
        %v1209 = vsub.f32 %v193, %v1208
        %v1210 = vand.u32 %v1209, 4294901760
        %1211 = vmatpush.msra.mxu0 %v1210
        %v1212 = vand.u32 %v189, 4294901760
        %v1213 = vsub.f32 %v189, %v1212
        %v1214 = vand.u32 %v1213, 4294901760
        %1215 = vmatpush.msra.mxu0 %v1214
        %v1216 = vand.u32 %v185, 4294901760
        %v1217 = vsub.f32 %v185, %v1216
        %v1218 = vand.u32 %v1217, 4294901760
        %1219 = vmatpush.msra.mxu0 %v1218
        %v1220 = vand.u32 %v181, 4294901760
        %v1221 = vsub.f32 %v181, %v1220
        %v1222 = vand.u32 %v1221, 4294901760
        %1223 = vmatpush.msra.mxu0 %v1222
        %v1224 = vand.u32 %v178, 4294901760
        %1225 = vmatmul.f32.gmra.mxu0 %v1224
        %v1226 = vpop.f32.mrf.mxu0
        %v1227 = vadd.f32 %v1158, %v1226
        %1228 = vdwg.mxu0
        %v1229 = vand.u32 %v241, 4294901760
        %1230 = vmatpush.msra.mxu0 %v1229
        %v1231 = vand.u32 %v237, 4294901760
        %1232 = vmatpush.msra.mxu0 %v1231
        %v1233 = vand.u32 %v233, 4294901760
        %1234 = vmatpush.msra.mxu0 %v1233
        %v1235 = vand.u32 %v229, 4294901760
        %1236 = vmatpush.msra.mxu0 %v1235
        %v1237 = vand.u32 %v225, 4294901760
        %1238 = vmatpush.msra.mxu0 %v1237
        %v1239 = vand.u32 %v221, 4294901760
        %1240 = vmatpush.msra.mxu0 %v1239
        %v1241 = vand.u32 %v217, 4294901760
        %1242 = vmatpush.msra.mxu0 %v1241
        %v1243 = vand.u32 %v213, 4294901760
        %1244 = vmatpush.msra.mxu0 %v1243
        %v1245 = vand.u32 %v209, 4294901760
        %1246 = vmatpush.msra.mxu0 %v1245
        %v1247 = vand.u32 %v205, 4294901760
        %1248 = vmatpush.msra.mxu0 %v1247
        %v1249 = vand.u32 %v201, 4294901760
        %1250 = vmatpush.msra.mxu0 %v1249
        %v1251 = vand.u32 %v197, 4294901760
        %1252 = vmatpush.msra.mxu0 %v1251
        %v1253 = vand.u32 %v193, 4294901760
        %1254 = vmatpush.msra.mxu0 %v1253
        %v1255 = vand.u32 %v189, 4294901760
        %1256 = vmatpush.msra.mxu0 %v1255
        %v1257 = vand.u32 %v185, 4294901760
        %1258 = vmatpush.msra.mxu0 %v1257
        %v1259 = vand.u32 %v181, 4294901760
        %1260 = vmatpush.msra.mxu0 %v1259
        %v1261 = vand.u32 %v178, 4294901760
        %1262 = vmatmul.f32.gmra.mxu0 %v1261
        %v1263 = vpop.f32.mrf.mxu0
        %v1264 = vadd.f32 %v1227, %v1263
        %1265 = vdwg.mxu0
        %v1266 = vand.u32 %v242, 4294901760
        %1267 = vmatpush.msra.mxu0 %v1266
        %v1268 = vand.u32 %v238, 4294901760
        %1269 = vmatpush.msra.mxu0 %v1268
        %v1270 = vand.u32 %v234, 4294901760
        %1271 = vmatpush.msra.mxu0 %v1270
        %v1272 = vand.u32 %v230, 4294901760
        %1273 = vmatpush.msra.mxu0 %v1272
        %v1274 = vand.u32 %v226, 4294901760
        %1275 = vmatpush.msra.mxu0 %v1274
        %v1276 = vand.u32 %v222, 4294901760
        %1277 = vmatpush.msra.mxu0 %v1276
        %v1278 = vand.u32 %v218, 4294901760
        %1279 = vmatpush.msra.mxu0 %v1278
        %v1280 = vand.u32 %v214, 4294901760
        %1281 = vmatpush.msra.mxu0 %v1280
        %v1282 = vand.u32 %v210, 4294901760
        %1283 = vmatpush.msra.mxu0 %v1282
        %v1284 = vand.u32 %v206, 4294901760
        %1285 = vmatpush.msra.mxu0 %v1284
        %v1286 = vand.u32 %v202, 4294901760
        %1287 = vmatpush.msra.mxu0 %v1286
        %v1288 = vand.u32 %v198, 4294901760
        %1289 = vmatpush.msra.mxu0 %v1288
        %v1290 = vand.u32 %v194, 4294901760
        %1291 = vmatpush.msra.mxu0 %v1290
        %v1292 = vand.u32 %v190, 4294901760
        %1293 = vmatpush.msra.mxu0 %v1292
        %v1294 = vand.u32 %v186, 4294901760
        %1295 = vmatpush.msra.mxu0 %v1294
        %v1296 = vand.u32 %v182, 4294901760
        %1297 = vmatpush.msra.mxu0 %v1296
        %v1298 = vand.u32 %v178, 4294901760
        %v1299 = vsub.f32 %v178, %v1298
        %v1300 = vand.u32 %v1299, 4294901760
        %v1301 = vsub.f32 %v1299, %v1300
        %v1302 = vand.u32 %v1301, 4294901760
        %1303 = vmatmul.f32.gmra.mxu0 %v1302
        %v1304 = vpop.f32.mrf.mxu0
        %v1305 = vadd.f32 0.0, %v1304
        %1306 = vdwg.mxu0
        %v1307 = vand.u32 %v242, 4294901760
        %v1308 = vsub.f32 %v242, %v1307
        %v1309 = vand.u32 %v1308, 4294901760
        %v1310 = vsub.f32 %v1308, %v1309
        %v1311 = vand.u32 %v1310, 4294901760
        %1312 = vmatpush.msra.mxu0 %v1311
        %v1313 = vand.u32 %v238, 4294901760
        %v1314 = vsub.f32 %v238, %v1313
        %v1315 = vand.u32 %v1314, 4294901760
        %v1316 = vsub.f32 %v1314, %v1315
        %v1317 = vand.u32 %v1316, 4294901760
        %1318 = vmatpush.msra.mxu0 %v1317
        %v1319 = vand.u32 %v234, 4294901760
        %v1320 = vsub.f32 %v234, %v1319
        %v1321 = vand.u32 %v1320, 4294901760
        %v1322 = vsub.f32 %v1320, %v1321
        %v1323 = vand.u32 %v1322, 4294901760
        %1324 = vmatpush.msra.mxu0 %v1323
        %v1325 = vand.u32 %v230, 4294901760
        %v1326 = vsub.f32 %v230, %v1325
        %v1327 = vand.u32 %v1326, 4294901760
        %v1328 = vsub.f32 %v1326, %v1327
        %v1329 = vand.u32 %v1328, 4294901760
        %1330 = vmatpush.msra.mxu0 %v1329
        %v1331 = vand.u32 %v226, 4294901760
        %v1332 = vsub.f32 %v226, %v1331
        %v1333 = vand.u32 %v1332, 4294901760
        %v1334 = vsub.f32 %v1332, %v1333
        %v1335 = vand.u32 %v1334, 4294901760
        %1336 = vmatpush.msra.mxu0 %v1335
        %v1337 = vand.u32 %v222, 4294901760
        %v1338 = vsub.f32 %v222, %v1337
        %v1339 = vand.u32 %v1338, 4294901760
        %v1340 = vsub.f32 %v1338, %v1339
        %v1341 = vand.u32 %v1340, 4294901760
        %1342 = vmatpush.msra.mxu0 %v1341
        %v1343 = vand.u32 %v218, 4294901760
        %v1344 = vsub.f32 %v218, %v1343
        %v1345 = vand.u32 %v1344, 4294901760
        %v1346 = vsub.f32 %v1344, %v1345
        %v1347 = vand.u32 %v1346, 4294901760
        %1348 = vmatpush.msra.mxu0 %v1347
        %v1349 = vand.u32 %v214, 4294901760
        %v1350 = vsub.f32 %v214, %v1349
        %v1351 = vand.u32 %v1350, 4294901760
        %v1352 = vsub.f32 %v1350, %v1351
        %v1353 = vand.u32 %v1352, 4294901760
        %1354 = vmatpush.msra.mxu0 %v1353
        %v1355 = vand.u32 %v210, 4294901760
        %v1356 = vsub.f32 %v210, %v1355
        %v1357 = vand.u32 %v1356, 4294901760
        %v1358 = vsub.f32 %v1356, %v1357
        %v1359 = vand.u32 %v1358, 4294901760
        %1360 = vmatpush.msra.mxu0 %v1359
        %v1361 = vand.u32 %v206, 4294901760
        %v1362 = vsub.f32 %v206, %v1361
        %v1363 = vand.u32 %v1362, 4294901760
        %v1364 = vsub.f32 %v1362, %v1363
        %v1365 = vand.u32 %v1364, 4294901760
        %1366 = vmatpush.msra.mxu0 %v1365
        %v1367 = vand.u32 %v202, 4294901760
        %v1368 = vsub.f32 %v202, %v1367
        %v1369 = vand.u32 %v1368, 4294901760
        %v1370 = vsub.f32 %v1368, %v1369
        %v1371 = vand.u32 %v1370, 4294901760
        %1372 = vmatpush.msra.mxu0 %v1371
        %v1373 = vand.u32 %v198, 4294901760
        %v1374 = vsub.f32 %v198, %v1373
        %v1375 = vand.u32 %v1374, 4294901760
        %v1376 = vsub.f32 %v1374, %v1375
        %v1377 = vand.u32 %v1376, 4294901760
        %1378 = vmatpush.msra.mxu0 %v1377
        %v1379 = vand.u32 %v194, 4294901760
        %v1380 = vsub.f32 %v194, %v1379
        %v1381 = vand.u32 %v1380, 4294901760
        %v1382 = vsub.f32 %v1380, %v1381
        %v1383 = vand.u32 %v1382, 4294901760
        %1384 = vmatpush.msra.mxu0 %v1383
        %v1385 = vand.u32 %v190, 4294901760
        %v1386 = vsub.f32 %v190, %v1385
        %v1387 = vand.u32 %v1386, 4294901760
        %v1388 = vsub.f32 %v1386, %v1387
        %v1389 = vand.u32 %v1388, 4294901760
        %1390 = vmatpush.msra.mxu0 %v1389
        %v1391 = vand.u32 %v186, 4294901760
        %v1392 = vsub.f32 %v186, %v1391
        %v1393 = vand.u32 %v1392, 4294901760
        %v1394 = vsub.f32 %v1392, %v1393
        %v1395 = vand.u32 %v1394, 4294901760
        %1396 = vmatpush.msra.mxu0 %v1395
        %v1397 = vand.u32 %v182, 4294901760
        %v1398 = vsub.f32 %v182, %v1397
        %v1399 = vand.u32 %v1398, 4294901760
        %v1400 = vsub.f32 %v1398, %v1399
        %v1401 = vand.u32 %v1400, 4294901760
        %1402 = vmatpush.msra.mxu0 %v1401
        %v1403 = vand.u32 %v178, 4294901760
        %1404 = vmatmul.f32.gmra.mxu0 %v1403
        %v1405 = vpop.f32.mrf.mxu0
        %v1406 = vadd.f32 %v1305, %v1405
        %1407 = vdwg.mxu0
        %v1408 = vand.u32 %v242, 4294901760
        %v1409 = vsub.f32 %v242, %v1408
        %1410 = vmatpush.msra.mxu0 %v1409
        %v1411 = vand.u32 %v238, 4294901760
        %v1412 = vsub.f32 %v238, %v1411
        %1413 = vmatpush.msra.mxu0 %v1412
        %v1414 = vand.u32 %v234, 4294901760
        %v1415 = vsub.f32 %v234, %v1414
        %1416 = vmatpush.msra.mxu0 %v1415
        %v1417 = vand.u32 %v230, 4294901760
        %v1418 = vsub.f32 %v230, %v1417
        %1419 = vmatpush.msra.mxu0 %v1418
        %v1420 = vand.u32 %v226, 4294901760
        %v1421 = vsub.f32 %v226, %v1420
        %1422 = vmatpush.msra.mxu0 %v1421
        %v1423 = vand.u32 %v222, 4294901760
        %v1424 = vsub.f32 %v222, %v1423
        %1425 = vmatpush.msra.mxu0 %v1424
        %v1426 = vand.u32 %v218, 4294901760
        %v1427 = vsub.f32 %v218, %v1426
        %1428 = vmatpush.msra.mxu0 %v1427
        %v1429 = vand.u32 %v214, 4294901760
        %v1430 = vsub.f32 %v214, %v1429
        %1431 = vmatpush.msra.mxu0 %v1430
        %v1432 = vand.u32 %v210, 4294901760
        %v1433 = vsub.f32 %v210, %v1432
        %1434 = vmatpush.msra.mxu0 %v1433
        %v1435 = vand.u32 %v206, 4294901760
        %v1436 = vsub.f32 %v206, %v1435
        %1437 = vmatpush.msra.mxu0 %v1436
        %v1438 = vand.u32 %v202, 4294901760
        %v1439 = vsub.f32 %v202, %v1438
        %1440 = vmatpush.msra.mxu0 %v1439
        %v1441 = vand.u32 %v198, 4294901760
        %v1442 = vsub.f32 %v198, %v1441
        %1443 = vmatpush.msra.mxu0 %v1442
        %v1444 = vand.u32 %v194, 4294901760
        %v1445 = vsub.f32 %v194, %v1444
        %1446 = vmatpush.msra.mxu0 %v1445
        %v1447 = vand.u32 %v190, 4294901760
        %v1448 = vsub.f32 %v190, %v1447
        %1449 = vmatpush.msra.mxu0 %v1448
        %v1450 = vand.u32 %v186, 4294901760
        %v1451 = vsub.f32 %v186, %v1450
        %1452 = vmatpush.msra.mxu0 %v1451
        %v1453 = vand.u32 %v182, 4294901760
        %v1454 = vsub.f32 %v182, %v1453
        %1455 = vmatpush.msra.mxu0 %v1454
        %v1456 = vand.u32 %v178, 4294901760
        %v1457 = vsub.f32 %v178, %v1456
        %1458 = vmatmul.f32.gmra.mxu0 %v1457
        %v1459 = vpop.f32.mrf.mxu0
        %v1460 = vadd.f32 %v1406, %v1459
        %1461 = vdwg.mxu0
        %v1462 = vand.u32 %v242, 4294901760
        %1463 = vmatpush.msra.mxu0 %v1462
        %v1464 = vand.u32 %v238, 4294901760
        %1465 = vmatpush.msra.mxu0 %v1464
        %v1466 = vand.u32 %v234, 4294901760
        %1467 = vmatpush.msra.mxu0 %v1466
        %v1468 = vand.u32 %v230, 4294901760
        %1469 = vmatpush.msra.mxu0 %v1468
        %v1470 = vand.u32 %v226, 4294901760
        %1471 = vmatpush.msra.mxu0 %v1470
        %v1472 = vand.u32 %v222, 4294901760
        %1473 = vmatpush.msra.mxu0 %v1472
        %v1474 = vand.u32 %v218, 4294901760
        %1475 = vmatpush.msra.mxu0 %v1474
        %v1476 = vand.u32 %v214, 4294901760
        %1477 = vmatpush.msra.mxu0 %v1476
        %v1478 = vand.u32 %v210, 4294901760
        %1479 = vmatpush.msra.mxu0 %v1478
        %v1480 = vand.u32 %v206, 4294901760
        %1481 = vmatpush.msra.mxu0 %v1480
        %v1482 = vand.u32 %v202, 4294901760
        %1483 = vmatpush.msra.mxu0 %v1482
        %v1484 = vand.u32 %v198, 4294901760
        %1485 = vmatpush.msra.mxu0 %v1484
        %v1486 = vand.u32 %v194, 4294901760
        %1487 = vmatpush.msra.mxu0 %v1486
        %v1488 = vand.u32 %v190, 4294901760
        %1489 = vmatpush.msra.mxu0 %v1488
        %v1490 = vand.u32 %v186, 4294901760
        %1491 = vmatpush.msra.mxu0 %v1490
        %v1492 = vand.u32 %v182, 4294901760
        %1493 = vmatpush.msra.mxu0 %v1492
        %v1494 = vand.u32 %v178, 4294901760
        %v1495 = vsub.f32 %v178, %v1494
        %v1496 = vand.u32 %v1495, 4294901760
        %1497 = vmatmul.f32.gmra.mxu0 %v1496
        %v1498 = vpop.f32.mrf.mxu0
        %v1499 = vadd.f32 %v1460, %v1498
        %1500 = vdwg.mxu0
        %v1501 = vand.u32 %v242, 4294901760
        %v1502 = vsub.f32 %v242, %v1501
        %v1503 = vand.u32 %v1502, 4294901760
        %1504 = vmatpush.msra.mxu0 %v1503
        %v1505 = vand.u32 %v238, 4294901760
        %v1506 = vsub.f32 %v238, %v1505
        %v1507 = vand.u32 %v1506, 4294901760
        %1508 = vmatpush.msra.mxu0 %v1507
        %v1509 = vand.u32 %v234, 4294901760
        %v1510 = vsub.f32 %v234, %v1509
        %v1511 = vand.u32 %v1510, 4294901760
        %1512 = vmatpush.msra.mxu0 %v1511
        %v1513 = vand.u32 %v230, 4294901760
        %v1514 = vsub.f32 %v230, %v1513
        %v1515 = vand.u32 %v1514, 4294901760
        %1516 = vmatpush.msra.mxu0 %v1515
        %v1517 = vand.u32 %v226, 4294901760
        %v1518 = vsub.f32 %v226, %v1517
        %v1519 = vand.u32 %v1518, 4294901760
        %1520 = vmatpush.msra.mxu0 %v1519
        %v1521 = vand.u32 %v222, 4294901760
        %v1522 = vsub.f32 %v222, %v1521
        %v1523 = vand.u32 %v1522, 4294901760
        %1524 = vmatpush.msra.mxu0 %v1523
        %v1525 = vand.u32 %v218, 4294901760
        %v1526 = vsub.f32 %v218, %v1525
        %v1527 = vand.u32 %v1526, 4294901760
        %1528 = vmatpush.msra.mxu0 %v1527
        %v1529 = vand.u32 %v214, 4294901760
        %v1530 = vsub.f32 %v214, %v1529
        %v1531 = vand.u32 %v1530, 4294901760
        %1532 = vmatpush.msra.mxu0 %v1531
        %v1533 = vand.u32 %v210, 4294901760
        %v1534 = vsub.f32 %v210, %v1533
        %v1535 = vand.u32 %v1534, 4294901760
        %1536 = vmatpush.msra.mxu0 %v1535
        %v1537 = vand.u32 %v206, 4294901760
        %v1538 = vsub.f32 %v206, %v1537
        %v1539 = vand.u32 %v1538, 4294901760
        %1540 = vmatpush.msra.mxu0 %v1539
        %v1541 = vand.u32 %v202, 4294901760
        %v1542 = vsub.f32 %v202, %v1541
        %v1543 = vand.u32 %v1542, 4294901760
        %1544 = vmatpush.msra.mxu0 %v1543
        %v1545 = vand.u32 %v198, 4294901760
        %v1546 = vsub.f32 %v198, %v1545
        %v1547 = vand.u32 %v1546, 4294901760
        %1548 = vmatpush.msra.mxu0 %v1547
        %v1549 = vand.u32 %v194, 4294901760
        %v1550 = vsub.f32 %v194, %v1549
        %v1551 = vand.u32 %v1550, 4294901760
        %1552 = vmatpush.msra.mxu0 %v1551
        %v1553 = vand.u32 %v190, 4294901760
        %v1554 = vsub.f32 %v190, %v1553
        %v1555 = vand.u32 %v1554, 4294901760
        %1556 = vmatpush.msra.mxu0 %v1555
        %v1557 = vand.u32 %v186, 4294901760
        %v1558 = vsub.f32 %v186, %v1557
        %v1559 = vand.u32 %v1558, 4294901760
        %1560 = vmatpush.msra.mxu0 %v1559
        %v1561 = vand.u32 %v182, 4294901760
        %v1562 = vsub.f32 %v182, %v1561
        %v1563 = vand.u32 %v1562, 4294901760
        %1564 = vmatpush.msra.mxu0 %v1563
        %v1565 = vand.u32 %v178, 4294901760
        %1566 = vmatmul.f32.gmra.mxu0 %v1565
        %v1567 = vpop.f32.mrf.mxu0
        %v1568 = vadd.f32 %v1499, %v1567
        %1569 = vdwg.mxu0
        %v1570 = vand.u32 %v242, 4294901760
        %1571 = vmatpush.msra.mxu0 %v1570
        %v1572 = vand.u32 %v238, 4294901760
        %1573 = vmatpush.msra.mxu0 %v1572
        %v1574 = vand.u32 %v234, 4294901760
        %1575 = vmatpush.msra.mxu0 %v1574
        %v1576 = vand.u32 %v230, 4294901760
        %1577 = vmatpush.msra.mxu0 %v1576
        %v1578 = vand.u32 %v226, 4294901760
        %1579 = vmatpush.msra.mxu0 %v1578
        %v1580 = vand.u32 %v222, 4294901760
        %1581 = vmatpush.msra.mxu0 %v1580
        %v1582 = vand.u32 %v218, 4294901760
        %1583 = vmatpush.msra.mxu0 %v1582
        %v1584 = vand.u32 %v214, 4294901760
        %1585 = vmatpush.msra.mxu0 %v1584
        %v1586 = vand.u32 %v210, 4294901760
        %1587 = vmatpush.msra.mxu0 %v1586
        %v1588 = vand.u32 %v206, 4294901760
        %1589 = vmatpush.msra.mxu0 %v1588
        %v1590 = vand.u32 %v202, 4294901760
        %1591 = vmatpush.msra.mxu0 %v1590
        %v1592 = vand.u32 %v198, 4294901760
        %1593 = vmatpush.msra.mxu0 %v1592
        %v1594 = vand.u32 %v194, 4294901760
        %1595 = vmatpush.msra.mxu0 %v1594
        %v1596 = vand.u32 %v190, 4294901760
        %1597 = vmatpush.msra.mxu0 %v1596
        %v1598 = vand.u32 %v186, 4294901760
        %1599 = vmatpush.msra.mxu0 %v1598
        %v1600 = vand.u32 %v182, 4294901760
        %1601 = vmatpush.msra.mxu0 %v1600
        %v1602 = vand.u32 %v178, 4294901760
        %1603 = vmatmul.f32.gmra.mxu0 %v1602
        %v1604 = vpop.f32.mrf.mxu0
        %v1605 = vadd.f32 %v1568, %v1604
        %1606 = vdwg.mxu0
        %1607 = vst [vmem:[%s177] sm:$0xff] %v582
        %1608 = vst [vmem:[%s177 + $0x8] sm:$0xff] %v923
        %1609 = vst [vmem:[%s177 + $0x10] sm:$0xff] %v1264
        %1610 = vst [vmem:[%s177 + $0x18] sm:$0xff] %v1605
        %s1611 = sand.u32 %s75, 1
        %s1612 = scalar_lea.sflag [#allocation4], %s1611
        %s1613 = sand.u32 %s75, 1
        %s1614 = smul.addr %s1613, 32
        %s1615 = scalar_lea.vmem [#allocation7], %s1614
        // Predicated region
        $region37: #{tpu_custom_call.1} parent=27 // pred_check
          %p1616 = pneg %p85
        $region38: #{tpu_custom_call.1} parent=27 // pred_check_branch
          %1618 = sbr.rel (%p1616) target = $region40
        $region39: #{tpu_custom_call.1} parent=27 // pred_region
          %1620 = vsyncadd %s1612, 0
          %s1621 = smul.addr %s20, 4
          %s1622 = smul.addr %s1621, 8
          %s1623 = scalar_lea.hbm %s2, %s1622
          %s1625 = sshll.u32 %s1615, 4
          %s1626 = int_to_ptr.vmem [resolvable:$true] %s1625
          %s1627 = sshll.u32 %s1623, 4
          %s1628 = int_to_ptr.hbm [resolvable:$true] %s1627
          %1630 = dma.vmem_to_hbm [thread:$0]  %s1626, 512, %s1628, %s1612
        $region40: #{tpu_custom_call.1} parent=27 // pred_fallthru
          _
      $region28: #{tpu_custom_call.1} parent=5 // pred_fallthru
        _
      %p1631 = scmp.le.s32.totalorder 2, %s15
      // Predicated region
      $region41: #{tpu_custom_call.1} parent=5 // pred_check
        %p1632 = pneg %p1631
      $region42: #{tpu_custom_call.1} parent=5 // pred_check_branch
        %1634 = sbr.rel (%p1632) target = $region44
      $region43: #{tpu_custom_call.1} parent=5 // pred_region
        %s1635 = ssub.s32 %s15, 2
        // Predicated region
        $region45: #{tpu_custom_call.1} parent=43 // pred_check
          %p1636 = pneg %p91
        $region46: #{tpu_custom_call.1} parent=43 // pred_check_branch
          %1638 = sbr.rel (%p1636) target = $region48
        $region47: #{tpu_custom_call.1} parent=43 // pred_region
          %s1639 = sand.u32 %s76, 1
          %s1640 = scalar_lea.sflag [#allocation4], %s1639
          %s1641 = sand.u32 %s76, 1
          %s1642 = smul.addr %s1641, 32
          %s1643 = scalar_lea.vmem [#allocation7], %s1642
          %1645 = dma.done %s1640, 512
        $region48: #{tpu_custom_call.1} parent=43 // pred_fallthru
          _
      $region44: #{tpu_custom_call.1} parent=5 // pred_fallthru
        _
    $region6: #{tpu_custom_call.1} parent=1 // loop_footer
      %s19 = sadd.s32 1, %s15
    $region7: #{tpu_custom_call.1} parent=1 // loop_footer_branch
      %14 = sbr.rel target = $region3
    $region8: #{tpu_custom_call.1} parent=1 // loop_exit
      _
    %1646 = vsyncpa [#allocation3], 1
    %s1647 = scalar_lea.sflag [#allocation3], 1
    %1648 = vsyncpa %s1647, 1
    %1649 = vsyncpa [#allocation6], 1
    %s1650 = scalar_lea.sflag [#allocation6], 1
    %1651 = vsyncpa %s1650, 1
    %1652 = vsyncpa [#allocation4], 1
    %s1653 = scalar_lea.sflag [#allocation4], 1
    %1654 = vsyncpa %s1653, 1

</llo_original>
